<compile_context>
chip_gen: v5e
topology: v5e:2x2
jax: 0.10.0
libtpu: 0.0.40
codegen_flags: <defaults>
</compile_context>

<pallas_src>
import numpy as np
import jax
import jax.numpy as jnp
from jax.experimental import pallas as pl
from jax.experimental.pallas import tpu as pltpu

NEG_SLOPE = 0.2
LN_EPS = 1e-5
HC = 8          # halo-scratch center row offset (8-aligned center stores)


def _leaky(x):
    return jnp.where(x >= 0, x, NEG_SLOPE * x)


def _round8(n):
    return -(-n // 8) * 8


# ------------------------- trace-time weight packing ---------------------------
def _grouped_conv_cat(taps, dil, pad, G):
    """Grouped ('G times per row') form of a same-padded Conv1d.

    taps: list of (Cin, Cout) channels-last tap matrices, tap index k.
    Returns vstack(A_{-1}, A_0, A_{+1}) of shape (3*G*Cin, G*Cout) so that
    OutG[q] = [XG[q-1] | XG[q] | XG[q+1]] @ result.
    """
    Cin, Cout = taps[0].shape
    zero = jnp.zeros((Cin, Cout), jnp.float32)
    blocks = {d: [[zero for _ in range(G)] for _ in range(G)] for d in (-1, 0, 1)}
    for g in range(G):
        for k in range(len(taps)):
            d, gp = divmod(g + dil * k - pad, G)
            blocks[d][gp][g] = blocks[d][gp][g] + taps[k]

    def asm(d):
        return jnp.concatenate(
            [jnp.concatenate(row, axis=1) for row in blocks[d]], axis=0)

    return jnp.concatenate([asm(-1), asm(0), asm(1)], axis=0)


def _convT_grouped_cat(wup):
    """ConvTranspose1d(K=12, stride=4, pad=4) with input grouped by 4 and output
    grouped by 16 interleaved steps. Returns (3*4*Cin, 16*Cout)."""
    Cin, Cout = wup.shape[0], wup.shape[1]
    zero = jnp.zeros((Cin, Cout), jnp.float32)
    blocks = {d: [[zero for _ in range(16)] for _ in range(4)] for d in (-1, 0, 1)}
    for s in range(16):                       # output slot within a 16-group
        p, r = divmod(s, 4)
        # out[16q+s] = h[4q+p+1]@W[:,:,r] + h[4q+p]@W[:,:,r+4] + h[4q+p-1]@W[:,:,r+8]
        for m, k in ((p + 1, r), (p, r + 4), (p - 1, r + 8)):
            d, gi = divmod(m, 4)
            blocks[d][gi][s] = blocks[d][gi][s] + wup[:, :, k]

    def asm(d):
        return jnp.concatenate(
            [jnp.concatenate(row, axis=1) for row in blocks[d]], axis=0)

    return jnp.concatenate([asm(-1), asm(0), asm(1)], axis=0)


def _pack_weights(params, Ci, Co):
    """Re-layout all module weights into one (R, 128k) f32 buffer in grouped
    fat-K matmul form. Returns (buffer, {name: row offset})."""
    f32 = jnp.float32
    w1 = params["w1"].astype(f32)                                  # (Ci, Ci+33, 7)

    # conv1 data part (K=7, pad=3), grouped by 4
    w1cat = _grouped_conv_cat([w1[:, :Ci, k].T for k in range(7)], 1, 3, 4)

    # DilatedBlocks with the 1x1 conv folded in (exact: no nonlinearity between)
    wp1 = params["wp1"].astype(f32)[:, :, 0].T
    wp2 = params["wp2"].astype(f32)[:, :, 0].T
    d1cat = _grouped_conv_cat(
        [params["wd1"].astype(f32)[:, :, k].T @ wp1 for k in range(3)], 1, 1, 4)
    d2cat = _grouped_conv_cat(
        [params["wd2"].astype(f32)[:, :, k].T @ wp2 for k in range(3)], 3, 3, 4)

    # ConvTranspose1d(12, stride 4, pad 4) -> 16-phase grouped
    upcat = _convT_grouped_cat(params["wup"].astype(f32))

    # final conv2 (K=7, pad=3) over the interleaved 4T axis, grouped by 16
    c2cat = _grouped_conv_cat(
        [params["w2"].astype(f32)[:, :, k].T for k in range(7)], 1, 3, 16)

    # step path: step is constant over time, so one (1,33)@(33,192) dot gives the
    # full contribution (tiled over 4 slots) and the first/last-row corrections
    # for taps that fall into the zero padding.
    ws = [w1[:, Ci:, k].T for k in range(7)]                       # (33, Ci)
    z33 = jnp.zeros((33, Ci), f32)
    wsum = ws[0] + ws[1] + ws[2] + ws[3] + ws[4] + ws[5] + ws[6]
    full4 = jnp.concatenate([wsum, wsum, wsum, wsum], axis=1)
    top4 = jnp.concatenate([ws[0] + ws[1] + ws[2], ws[0] + ws[1], ws[0], z33], axis=1)
    bot4 = jnp.concatenate([z33, ws[6], ws[5] + ws[6], ws[4] + ws[5] + ws[6]], axis=1)
    wstep = jnp.concatenate([full4, top4, bot4], axis=1)           # (33, 12*Ci)

    # biases, tiled over the grouped slots (1x1-conv biases folded)
    b1 = jnp.tile(params["b1"].astype(f32).reshape(1, Ci), (1, 4))
    bd1 = jnp.tile(params["bd1"].astype(f32).reshape(1, Ci) @ wp1
                   + params["bp1"].astype(f32).reshape(1, Ci), (1, 4))
    bd2 = jnp.tile(params["bd2"].astype(f32).reshape(1, Ci) @ wp2
                   + params["bp2"].astype(f32).reshape(1, Ci), (1, 4))
    bup = jnp.tile(params["bup"].astype(f32).reshape(1, Ci), (1, 16))
    b2 = jnp.tile(params["b2"].astype(f32).reshape(1, Co), (1, 16))

    blocks = [("w1", w1cat), ("d1", d1cat), ("d2", d2cat), ("up", upcat),
              ("c2", c2cat), ("ws", wstep), ("b1", b1), ("bd1", bd1),
              ("bd2", bd2), ("bup", bup), ("b2", b2)]

    ncols = -(-max(a.shape[1] for _, a in blocks) // 128) * 128
    parts, off, cur = [], {}, 0
    for name, a in blocks:
        r, c = a.shape
        rp = _round8(r)                           # keep row offsets 8-aligned
        off[name] = cur
        parts.append(jnp.pad(a, ((0, rp - r), (0, ncols - c))))
        cur += rp
    return jnp.concatenate(parts, axis=0), off


# --------------------------------- forward -------------------------------------
def upsampling_block_forward(x, d, step, params):
    """x, d: (B, Cin, T); step: (B, 33). Returns (B, Cout, 4*T) (PyTorch NCT)."""
    B, Ci, T = x.shape
    Co = params["b2"].shape[0]
    assert T % 4 == 0 and T >= 8, "grouped formulation assumes T % 4 == 0, T >= 8"
    Tq = T // 4
    C4i, C16i, C16o = 4 * Ci, 16 * Ci, 16 * Co

    # inputs in grouped layout: (B, Tq, 4*Ci), lanes ordered (time-slot, channel)
    xt = jnp.transpose(x, (0, 2, 1)).astype(jnp.float32).reshape(B, Tq, C4i)
    dt = jnp.transpose(d, (0, 2, 1)).astype(jnp.float32).reshape(B, Tq, C4i)
    st = step.reshape(B, 1, 33).astype(jnp.float32)
    wbuf, off = _pack_weights(params, Ci, Co)

    def kernel(x_ref, d_ref, s_ref, w_ref, o_ref, h_ref, z_ref):
        def w(name, nr, nc):                       # static packed-weight slice
            base = off[name]
            return w_ref[base:base + nr, :nc]

        # zero ONLY the two 1-row halos each scratch actually reads (centers are
        # fully rewritten before every read; not gated on program_id -> megacore
        # safe).
        h_ref[HC - 1:HC, :] = jnp.zeros((1, C4i), jnp.float32)
        h_ref[HC + Tq:HC + Tq + 1, :] = jnp.zeros((1, C4i), jnp.float32)
        z_ref[HC - 1:HC, :] = jnp.zeros((1, C16i), jnp.float32)
        z_ref[HC + Tq:HC + Tq + 1, :] = jnp.zeros((1, C16i), jnp.float32)

        # ---- conv1 (K=7, pad=3) on x + d, plus analytic step path ----
        h0 = x_ref[0] + d_ref[0]                               # (Tq, 4Ci)
        h_ref[HC:HC + Tq, :] = h0
        hm = h_ref[HC - 1:HC - 1 + Tq, :]
        hp = h_ref[HC + 1:HC + 1 + Tq, :]
        L = jnp.concatenate([hm, h0, hp], axis=1)              # (Tq, 12*Ci)
        srow = jnp.dot(s_ref[0], w("ws", 33, 3 * C4i),
                       preferred_element_type=jnp.float32)     # (1, 12*Ci)
        o1 = (jnp.dot(L, w("w1", 3 * C4i, C4i),
                      preferred_element_type=jnp.float32)
              + srow[:, 0:C4i] + w("b1", 1, C4i))
        h_ref[HC:HC + Tq, :] = _leaky(o1)
        # first / last row: remove step taps that fell into the zero padding
        h_ref[HC:HC + 1, :] = _leaky(o1[0:1, :] - srow[:, C4i:2 * C4i])
        h_ref[HC + Tq - 1:HC + Tq, :] = _leaky(
            o1[Tq - 1:Tq, :] - srow[:, 2 * C4i:3 * C4i])

        # ---- DilatedBlock(dilation=1), 1x1 conv folded ----
        hm = h_ref[HC - 1:HC - 1 + Tq, :]
        hc = h_ref[HC:HC + Tq, :]
        hp = h_ref[HC + 1:HC + 1 + Tq, :]
        L = jnp.concatenate([hm, hc, hp], axis=1)
        h = _leaky(jnp.dot(L, w("d1", 3 * C4i, C4i),
                           preferred_element_type=jnp.float32)
                   + w("bd1", 1, C4i) + hc)
        h_ref[HC:HC + Tq, :] = h

        # ---- DilatedBlock(dilation=3) ----
        hm = h_ref[HC - 1:HC - 1 + Tq, :]
        hp = h_ref[HC + 1:HC + 1 + Tq, :]
        L = jnp.concatenate([hm, h, hp], axis=1)
        h = _leaky(jnp.dot(L, w("d2", 3 * C4i, C4i),
                           preferred_element_type=jnp.float32)
                   + w("bd2", 1, C4i) + h)
        h_ref[HC:HC + Tq, :] = h

        # ---- ConvTranspose1d(12, stride=4, pad=4) + leaky, 16-phase grouped ----
        hm = h_ref[HC - 1:HC - 1 + Tq, :]
        hp = h_ref[HC + 1:HC + 1 + Tq, :]
        L = jnp.concatenate([hm, h, hp], axis=1)
        y = _leaky(jnp.dot(L, w("up", 3 * C4i, C16i),
                           preferred_element_type=jnp.float32)
                   + w("bup", 1, C16i))

        # ---- LayerNorm over the whole per-sample (Cin, 4T) slab, one pass.
        # Module creates the LN lazily (untrained) => identity affine; stats are
        # order-independent so the grouped layout is fine.
        n = float(Tq * C16i)
        s1 = jnp.sum(y, keepdims=True)
        s2 = jnp.sum(y * y, keepdims=True)
        mu = s1 / n
        var = s2 / n - mu * mu
        z = (y - mu) * jax.lax.rsqrt(var + LN_EPS)

        # ---- final conv2 (K=7, pad=3) over the interleaved 4T axis ----
        z_ref[HC:HC + Tq, :] = z
        zm = z_ref[HC - 1:HC - 1 + Tq, :]
        zp = z_ref[HC + 1:HC + 1 + Tq, :]
        Lz = jnp.concatenate([zm, z, zp], axis=1)              # (Tq, 48*Ci)
        o_ref[0] = (jnp.dot(Lz, w("c2", 3 * C16i, C16o),
                            preferred_element_type=jnp.float32)
                    + w("b2", 1, C16o))                        # (Tq, 16*Co) lane-dense

    # rough VMEM budget (scratches + double-buffered blocks + packed weights +
    # headroom for in-kernel temporaries), clamped to [32, 64] MiB.
    vmem_bytes = 4 * (wbuf.size
                      + Tq * (4 * C4i + 2 * C16o)
                      + (Tq + 2 * HC) * (C4i + C16i)
                      + 10 * Tq * C16i) + (2 << 20)
    vmem_limit = int(min(max(vmem_bytes, 32 * 1024 * 1024), 64 * 1024 * 1024))

    # TODO(synk): for very large T (or B==1 on v7x) add a T-tile grid axis with a
    # two-pass LayerNorm so work splits across TensorCores / fits 64 MiB VMEM.
    out = pl.pallas_call(
        kernel,
        out_shape=jax.ShapeDtypeStruct((B, Tq, C16o), jnp.float32),
        grid=(B,),
        in_specs=[pl.BlockSpec((1, Tq, C4i), lambda b: (b, 0, 0)),
                  pl.BlockSpec((1, Tq, C4i), lambda b: (b, 0, 0)),
                  pl.BlockSpec((1, 1, 33), lambda b: (b, 0, 0)),
                  pl.BlockSpec(wbuf.shape, lambda b: (0, 0))],
        out_specs=pl.BlockSpec((1, Tq, C16o), lambda b: (b, 0, 0)),
        scratch_shapes=[pltpu.VMEM((Tq + 2 * HC, C4i), jnp.float32),
                        pltpu.VMEM((Tq + 2 * HC, C16i), jnp.float32)],
        compiler_params=pltpu.CompilerParams(
            dimension_semantics=("parallel",),
            vmem_limit_bytes=vmem_limit),
    )(xt, dt, st, wbuf)

    # (B, Tq, 16*Co) -> (B, Tq, 16, Co) -> (B, Co, Tq, 16) -> (B, Co, 4T)
    return jnp.transpose(out.reshape(B, Tq, 16, Co), (0, 3, 1, 2)).reshape(B, Co, 4 * T)


# ------------------------- NumPy reference (PyTorch semantics) ----------------
def _np_leaky(x):
    return np.where(x >= 0, x, NEG_SLOPE * x)


def _np_conv1d(x, w, b, pad, dil):
    B, Cin, T = x.shape
    Cout, _, K = w.shape
    xp = np.zeros((B, Cin, T + 2 * pad), np.float64)
    xp[:, :, pad:pad + T] = x
    Tout = T + 2 * pad - dil * (K - 1)
    out = np.zeros((B, Cout, Tout), np.float64)
    for k in range(K):
        out += np.einsum("bct,oc->bot", xp[:, :, k * dil:k * dil + Tout], w[:, :, k])
    return out + b[None, :, None]


def _np_convT(x, w, b, stride, pad):
    B, Cin, T = x.shape
    _, Cout, K = w.shape
    Tout = (T - 1) * stride - 2 * pad + K
    out = np.zeros((B, Cout, Tout), np.float64)
    for t in range(T):
        for k in range(K):
            j = t * stride - pad + k
            if 0 <= j < Tout:
                out[:, :, j] += np.einsum("bc,co->bo", x[:, :, t], w[:, :, k])
    return out + b[None, :, None]


def _np_reference(x, d, step, p):
    B, Cin, T = x.shape
    h = (x + d).astype(np.float64)
    st = np.repeat(step.reshape(B, 33, 1), T, axis=2)
    h = np.concatenate([h, st], axis=1)
    h = _np_leaky(_np_conv1d(h, p["w1"], p["b1"], 3, 1))
    t = _np_conv1d(h, p["wd1"], p["bd1"], 1, 1)
    t = _np_conv1d(t, p["wp1"], p["bp1"], 0, 1)
    h = _np_leaky(t + h)
    t = _np_conv1d(h, p["wd2"], p["bd2"], 3, 3)
    t = _np_conv1d(t, p["wp2"], p["bp2"], 0, 1)
    h = _np_leaky(t + h)
    h = _np_leaky(_np_convT(h, p["wup"], p["bup"], 4, 4))
    mu = h.mean(axis=(1, 2), keepdims=True)
    var = h.var(axis=(1, 2), keepdims=True)
    h = (h - mu) / np.sqrt(var + LN_EPS)
    return _np_conv1d(h, p["w2"], p["b2"], 3, 1)


# ----------------------------------- main --------------------------------------
if __name__ == "__main__":
    B, Cin, Cout, T = 2, 16, 8, 16
    key = jax.random.PRNGKey(0)
    keys = jax.random.split(key, 20)

    def init(k, shape, scale=0.1):
        return scale * jax.random.normal(k, shape, jnp.float32)

    params = {
        "w1": init(keys[0], (Cin, Cin + 33, 7)), "b1": init(keys[1], (Cin,)),
        "wd1": init(keys[2], (Cin, Cin, 3)),     "bd1": init(keys[3], (Cin,)),
        "wp1": init(keys[4], (Cin, Cin, 1)),     "bp1": init(keys[5], (Cin,)),
        "wd2": init(keys[6], (Cin, Cin, 3)),     "bd2": init(keys[7], (Cin,)),
        "wp2": init(keys[8], (Cin, Cin, 1)),     "bp2": init(keys[9], (Cin,)),
        "wup": init(keys[10], (Cin, Cin, 12)),   "bup": init(keys[11], (Cin,)),
        "w2": init(keys[12], (Cout, Cin, 7)),    "b2": init(keys[13], (Cout,)),
    }

    x = jax.random.normal(keys[14], (B, Cin, T), jnp.float32)
    d = jax.random.normal(keys[15], (B, Cin, T), jnp.float32)
    step = jax.random.normal(keys[16], (B, 33), jnp.float32)

    out = upsampling_block_forward(x, d, step, params)
    out = jax.block_until_ready(out)
    assert out.shape == (B, Cout, 4 * T), out.shape

    p_np = {k: np.asarray(v, np.float64) for k, v in params.items()}
    ref = _np_reference(np.asarray(x, np.float64), np.asarray(d, np.float64),
                        np.asarray(step, np.float64), p_np)
    err = np.max(np.abs(np.asarray(out, np.float64) - ref))
    assert err < 1e-3, f"max abs error {err}"
    print("KERNEL_OK")
</pallas_src>

<mosaic_0001>
module attributes {stable_mosaic.version = 11 : i64} {
  func.func @kernel(%arg0: i32, %arg1: memref<1x4x64xf32, #tpu.memory_space<vmem>>, %arg2: memref<1x4x64xf32, #tpu.memory_space<vmem>>, %arg3: memref<1x1x33xf32, #tpu.memory_space<vmem>>, %arg4: memref<1616x256xf32, #tpu.memory_space<vmem>>, %arg5: memref<1x4x128xf32, #tpu.memory_space<vmem>>, %arg6: memref<20x64xf32, #tpu.memory_space<vmem>>, %arg7: memref<20x256xf32, #tpu.memory_space<vmem>>) attributes {dimension_semantics = [#tpu.dimension_semantics<parallel>], iteration_bounds = array<i64: 2>, scalar_prefetch = 0 : i64, scratch_operands = 2 : i64, tpu.core_type = #tpu.core_type<tc>, window_params = [{transform_indices = @transform_0, window_bounds = array<i64: 1, 4, 64>}, {transform_indices = @transform_1, window_bounds = array<i64: 1, 4, 64>}, {transform_indices = @transform_2, window_bounds = array<i64: 1, 1, 33>}, {pipeline_mode = #tpu.pipeline_mode<synchronous>, transform_indices = @transform_3, window_bounds = array<i64: 1616, 256>}, {transform_indices = @transform_4, window_bounds = array<i64: 1, 4, 128>}]} {
    %cst = arith.constant 0.000000e+00 : f32
    %0 = vector.broadcast %cst : f32 to vector<1x64xf32>
    %c7 = arith.constant 7 : index
    %c0 = arith.constant 0 : index
    %1 = vector.load %arg6[%c7, %c0] : memref<20x64xf32, #tpu.memory_space<vmem>>, vector<1x64xf32>
    tpu.vector_store %arg6[%c7, %c0], %0 {strides = array<i32>} : memref<20x64xf32, #tpu.memory_space<vmem>>, vector<1x64xf32>,
    %cst_0 = arith.constant 0.000000e+00 : f32
    %2 = vector.broadcast %cst_0 : f32 to vector<1x64xf32>
    %c12 = arith.constant 12 : index
    %c0_1 = arith.constant 0 : index
    %3 = vector.load %arg6[%c12, %c0_1] : memref<20x64xf32, #tpu.memory_space<vmem>>, vector<1x64xf32>
    tpu.vector_store %arg6[%c12, %c0_1], %2 {strides = array<i32>} : memref<20x64xf32, #tpu.memory_space<vmem>>, vector<1x64xf32>,
    %cst_2 = arith.constant 0.000000e+00 : f32
    %4 = vector.broadcast %cst_2 : f32 to vector<1x256xf32>
    %c7_3 = arith.constant 7 : index
    %c0_4 = arith.constant 0 : index
    %5 = vector.load %arg7[%c7_3, %c0_4] : memref<20x256xf32, #tpu.memory_space<vmem>>, vector<1x256xf32>
    tpu.vector_store %arg7[%c7_3, %c0_4], %4 {strides = array<i32>} : memref<20x256xf32, #tpu.memory_space<vmem>>, vector<1x256xf32>,
    %cst_5 = arith.constant 0.000000e+00 : f32
    %6 = vector.broadcast %cst_5 : f32 to vector<1x256xf32>
    %c12_6 = arith.constant 12 : index
    %c0_7 = arith.constant 0 : index
    %7 = vector.load %arg7[%c12_6, %c0_7] : memref<20x256xf32, #tpu.memory_space<vmem>>, vector<1x256xf32>
    tpu.vector_store %arg7[%c12_6, %c0_7], %6 {strides = array<i32>} : memref<20x256xf32, #tpu.memory_space<vmem>>, vector<1x256xf32>,
    %c0_8 = arith.constant 0 : index
    %c0_9 = arith.constant 0 : index
    %c0_10 = arith.constant 0 : index
    %8 = vector.load %arg1[%c0_8, %c0_9, %c0_10] : memref<1x4x64xf32, #tpu.memory_space<vmem>>, vector<1x4x64xf32>
    %9 = vector.shape_cast %8 : vector<1x4x64xf32> to vector<4x64xf32>
    %c0_11 = arith.constant 0 : index
    %c0_12 = arith.constant 0 : index
    %c0_13 = arith.constant 0 : index
    %10 = vector.load %arg2[%c0_11, %c0_12, %c0_13] : memref<1x4x64xf32, #tpu.memory_space<vmem>>, vector<1x4x64xf32>
    %11 = vector.shape_cast %10 : vector<1x4x64xf32> to vector<4x64xf32>
    %12 = arith.addf %9, %11 : vector<4x64xf32>
    %c8 = arith.constant 8 : index
    %c0_14 = arith.constant 0 : index
    %13 = vector.load %arg6[%c8, %c0_14] : memref<20x64xf32, #tpu.memory_space<vmem>>, vector<4x64xf32>
    tpu.vector_store %arg6[%c8, %c0_14], %12 {strides = array<i32>} : memref<20x64xf32, #tpu.memory_space<vmem>>, vector<4x64xf32>,
    %c7_15 = arith.constant 7 : index
    %c0_16 = arith.constant 0 : index
    %14 = vector.load %arg6[%c7_15, %c0_16] : memref<20x64xf32, #tpu.memory_space<vmem>>, vector<4x64xf32>
    %c9 = arith.constant 9 : index
    %c0_17 = arith.constant 0 : index
    %15 = vector.load %arg6[%c9, %c0_17] : memref<20x64xf32, #tpu.memory_space<vmem>>, vector<4x64xf32>
    %16 = tpu.concatenate %14, %12, %15 in 1 : vector<4x64xf32>, vector<4x64xf32>, vector<4x64xf32> -> vector<4x192xf32>
    %c0_18 = arith.constant 0 : index
    %c0_19 = arith.constant 0 : index
    %c0_20 = arith.constant 0 : index
    %17 = vector.load %arg3[%c0_18, %c0_19, %c0_20] : memref<1x1x33xf32, #tpu.memory_space<vmem>>, vector<1x1x33xf32>
    %18 = vector.shape_cast %17 : vector<1x1x33xf32> to vector<1x33xf32>
    %c1536 = arith.constant 1536 : index
    %c0_21 = arith.constant 0 : index
    %19 = vector.load %arg4[%c1536, %c0_21] : memref<1616x256xf32, #tpu.memory_space<vmem>>, vector<33x192xf32>
    %cst_22 = arith.constant dense<0.000000e+00> : vector<1x192xf32>
    %20 = tpu.matmul %18, %19, %cst_22 {dimension_numbers = #tpu.dot_dimension_numbers<[1], [0], [0], [1], [0, 0, 1, 1], [], []>} : vector<1x33xf32>, vector<33x192xf32>, vector<1x192xf32> -> vector<1x192xf32>
    %c0_23 = arith.constant 0 : index
    %c0_24 = arith.constant 0 : index
    %21 = vector.load %arg4[%c0_23, %c0_24] : memref<1616x256xf32, #tpu.memory_space<vmem>>, vector<192x64xf32>
    %cst_25 = arith.constant dense<0.000000e+00> : vector<4x64xf32>
    %22 = tpu.matmul %16, %21, %cst_25 {dimension_numbers = #tpu.dot_dimension_numbers<[1], [0], [0], [1], [0, 0, 1, 1], [], []>} : vector<4x192xf32>, vector<192x64xf32>, vector<4x64xf32> -> vector<4x64xf32>
    %23 = vector.extract_strided_slice %20 {offsets = [0, 0], sizes = [1, 64], strides = [1, 1]} : vector<1x192xf32> to vector<1x64xf32>
    %24 = vector.broadcast %23 : vector<1x64xf32> to vector<4x64xf32>
    %25 = arith.addf %22, %24 : vector<4x64xf32>
    %c1576 = arith.constant 1576 : index
    %c0_26 = arith.constant 0 : index
    %26 = vector.load %arg4[%c1576, %c0_26] : memref<1616x256xf32, #tpu.memory_space<vmem>>, vector<1x64xf32>
    %27 = vector.broadcast %26 : vector<1x64xf32> to vector<4x64xf32>
    %28 = arith.addf %25, %27 : vector<4x64xf32>
    %cst_27 = arith.constant 0.000000e+00 : f32
    %29 = vector.broadcast %cst_27 : f32 to vector<4x64xf32>
    %30 = arith.cmpf oge, %28, %29 : vector<4x64xf32>
    %cst_28 = arith.constant 2.000000e-01 : f32
    %31 = vector.broadcast %cst_28 : f32 to vector<4x64xf32>
    %32 = arith.mulf %31, %28 : vector<4x64xf32>
    %33 = arith.select %30, %28, %32 : vector<4x64xi1>, vector<4x64xf32>
    %c8_29 = arith.constant 8 : index
    %c0_30 = arith.constant 0 : index
    %34 = vector.load %arg6[%c8_29, %c0_30] : memref<20x64xf32, #tpu.memory_space<vmem>>, vector<4x64xf32>
    tpu.vector_store %arg6[%c8_29, %c0_30], %33 {strides = array<i32>} : memref<20x64xf32, #tpu.memory_space<vmem>>, vector<4x64xf32>,
    %35 = vector.extract_strided_slice %28 {offsets = [0, 0], sizes = [1, 64], strides = [1, 1]} : vector<4x64xf32> to vector<1x64xf32>
    %36 = vector.extract_strided_slice %20 {offsets = [0, 64], sizes = [1, 64], strides = [1, 1]} : vector<1x192xf32> to vector<1x64xf32>
    %37 = arith.subf %35, %36 : vector<1x64xf32>
    %cst_31 = arith.constant 0.000000e+00 : f32
    %38 = vector.broadcast %cst_31 : f32 to vector<1x64xf32>
    %39 = arith.cmpf oge, %37, %38 : vector<1x64xf32>
    %cst_32 = arith.constant 2.000000e-01 : f32
    %40 = vector.broadcast %cst_32 : f32 to vector<1x64xf32>
    %41 = arith.mulf %40, %37 : vector<1x64xf32>
    %42 = arith.select %39, %37, %41 : vector<1x64xi1>, vector<1x64xf32>
    %c8_33 = arith.constant 8 : index
    %c0_34 = arith.constant 0 : index
    %43 = vector.load %arg6[%c8_33, %c0_34] : memref<20x64xf32, #tpu.memory_space<vmem>>, vector<1x64xf32>
    tpu.vector_store %arg6[%c8_33, %c0_34], %42 {strides = array<i32>} : memref<20x64xf32, #tpu.memory_space<vmem>>, vector<1x64xf32>,
    %44 = vector.extract_strided_slice %28 {offsets = [3, 0], sizes = [1, 64], strides = [1, 1]} : vector<4x64xf32> to vector<1x64xf32>
    %45 = vector.extract_strided_slice %20 {offsets = [0, 128], sizes = [1, 64], strides = [1, 1]} : vector<1x192xf32> to vector<1x64xf32>
    %46 = arith.subf %44, %45 : vector<1x64xf32>
    %cst_35 = arith.constant 0.000000e+00 : f32
    %47 = vector.broadcast %cst_35 : f32 to vector<1x64xf32>
    %48 = arith.cmpf oge, %46, %47 : vector<1x64xf32>
    %cst_36 = arith.constant 2.000000e-01 : f32
    %49 = vector.broadcast %cst_36 : f32 to vector<1x64xf32>
    %50 = arith.mulf %49, %46 : vector<1x64xf32>
    %51 = arith.select %48, %46, %50 : vector<1x64xi1>, vector<1x64xf32>
    %c11 = arith.constant 11 : index
    %c0_37 = arith.constant 0 : index
    %52 = vector.load %arg6[%c11, %c0_37] : memref<20x64xf32, #tpu.memory_space<vmem>>, vector<1x64xf32>
    tpu.vector_store %arg6[%c11, %c0_37], %51 {strides = array<i32>} : memref<20x64xf32, #tpu.memory_space<vmem>>, vector<1x64xf32>,
    %c7_38 = arith.constant 7 : index
    %c0_39 = arith.constant 0 : index
    %53 = vector.load %arg6[%c7_38, %c0_39] : memref<20x64xf32, #tpu.memory_space<vmem>>, vector<4x64xf32>
    %c8_40 = arith.constant 8 : index
    %c0_41 = arith.constant 0 : index
    %54 = vector.load %arg6[%c8_40, %c0_41] : memref<20x64xf32, #tpu.memory_space<vmem>>, vector<4x64xf32>
    %c9_42 = arith.constant 9 : index
    %c0_43 = arith.constant 0 : index
    %55 = vector.load %arg6[%c9_42, %c0_43] : memref<20x64xf32, #tpu.memory_space<vmem>>, vector<4x64xf32>
    %56 = tpu.concatenate %53, %54, %55 in 1 : vector<4x64xf32>, vector<4x64xf32>, vector<4x64xf32> -> vector<4x192xf32>
    %c192 = arith.constant 192 : index
    %c0_44 = arith.constant 0 : index
    %57 = vector.load %arg4[%c192, %c0_44] : memref<1616x256xf32, #tpu.memory_space<vmem>>, vector<192x64xf32>
    %cst_45 = arith.constant dense<0.000000e+00> : vector<4x64xf32>
    %58 = tpu.matmul %56, %57, %cst_45 {dimension_numbers = #tpu.dot_dimension_numbers<[1], [0], [0], [1], [0, 0, 1, 1], [], []>} : vector<4x192xf32>, vector<192x64xf32>, vector<4x64xf32> -> vector<4x64xf32>
    %c1584 = arith.constant 1584 : index
    %c0_46 = arith.constant 0 : index
    %59 = vector.load %arg4[%c1584, %c0_46] : memref<1616x256xf32, #tpu.memory_space<vmem>>, vector<1x64xf32>
    %60 = vector.broadcast %59 : vector<1x64xf32> to vector<4x64xf32>
    %61 = arith.addf %58, %60 : vector<4x64xf32>
    %62 = arith.addf %61, %54 : vector<4x64xf32>
    %cst_47 = arith.constant 0.000000e+00 : f32
    %63 = vector.broadcast %cst_47 : f32 to vector<4x64xf32>
    %64 = arith.cmpf oge, %62, %63 : vector<4x64xf32>
    %cst_48 = arith.constant 2.000000e-01 : f32
    %65 = vector.broadcast %cst_48 : f32 to vector<4x64xf32>
    %66 = arith.mulf %65, %62 : vector<4x64xf32>
    %67 = arith.select %64, %62, %66 : vector<4x64xi1>, vector<4x64xf32>
    %c8_49 = arith.constant 8 : index
    %c0_50 = arith.constant 0 : index
    %68 = vector.load %arg6[%c8_49, %c0_50] : memref<20x64xf32, #tpu.memory_space<vmem>>, vector<4x64xf32>
    tpu.vector_store %arg6[%c8_49, %c0_50], %67 {strides = array<i32>} : memref<20x64xf32, #tpu.memory_space<vmem>>, vector<4x64xf32>,
    %c7_51 = arith.constant 7 : index
    %c0_52 = arith.constant 0 : index
    %69 = vector.load %arg6[%c7_51, %c0_52] : memref<20x64xf32, #tpu.memory_space<vmem>>, vector<4x64xf32>
    %c9_53 = arith.constant 9 : index
    %c0_54 = arith.constant 0 : index
    %70 = vector.load %arg6[%c9_53, %c0_54] : memref<20x64xf32, #tpu.memory_space<vmem>>, vector<4x64xf32>
    %71 = tpu.concatenate %69, %67, %70 in 1 : vector<4x64xf32>, vector<4x64xf32>, vector<4x64xf32> -> vector<4x192xf32>
    %c384 = arith.constant 384 : index
    %c0_55 = arith.constant 0 : index
    %72 = vector.load %arg4[%c384, %c0_55] : memref<1616x256xf32, #tpu.memory_space<vmem>>, vector<192x64xf32>
    %cst_56 = arith.constant dense<0.000000e+00> : vector<4x64xf32>
    %73 = tpu.matmul %71, %72, %cst_56 {dimension_numbers = #tpu.dot_dimension_numbers<[1], [0], [0], [1], [0, 0, 1, 1], [], []>} : vector<4x192xf32>, vector<192x64xf32>, vector<4x64xf32> -> vector<4x64xf32>
    %c1592 = arith.constant 1592 : index
    %c0_57 = arith.constant 0 : index
    %74 = vector.load %arg4[%c1592, %c0_57] : memref<1616x256xf32, #tpu.memory_space<vmem>>, vector<1x64xf32>
    %75 = vector.broadcast %74 : vector<1x64xf32> to vector<4x64xf32>
    %76 = arith.addf %73, %75 : vector<4x64xf32>
    %77 = arith.addf %76, %67 : vector<4x64xf32>
    %cst_58 = arith.constant 0.000000e+00 : f32
    %78 = vector.broadcast %cst_58 : f32 to vector<4x64xf32>
    %79 = arith.cmpf oge, %77, %78 : vector<4x64xf32>
    %cst_59 = arith.constant 2.000000e-01 : f32
    %80 = vector.broadcast %cst_59 : f32 to vector<4x64xf32>
    %81 = arith.mulf %80, %77 : vector<4x64xf32>
    %82 = arith.select %79, %77, %81 : vector<4x64xi1>, vector<4x64xf32>
    %c8_60 = arith.constant 8 : index
    %c0_61 = arith.constant 0 : index
    %83 = vector.load %arg6[%c8_60, %c0_61] : memref<20x64xf32, #tpu.memory_space<vmem>>, vector<4x64xf32>
    tpu.vector_store %arg6[%c8_60, %c0_61], %82 {strides = array<i32>} : memref<20x64xf32, #tpu.memory_space<vmem>>, vector<4x64xf32>,
    %c7_62 = arith.constant 7 : index
    %c0_63 = arith.constant 0 : index
    %84 = vector.load %arg6[%c7_62, %c0_63] : memref<20x64xf32, #tpu.memory_space<vmem>>, vector<4x64xf32>
    %c9_64 = arith.constant 9 : index
    %c0_65 = arith.constant 0 : index
    %85 = vector.load %arg6[%c9_64, %c0_65] : memref<20x64xf32, #tpu.memory_space<vmem>>, vector<4x64xf32>
    %86 = tpu.concatenate %84, %82, %85 in 1 : vector<4x64xf32>, vector<4x64xf32>, vector<4x64xf32> -> vector<4x192xf32>
    %c576 = arith.constant 576 : index
    %c0_66 = arith.constant 0 : index
    %87 = vector.load %arg4[%c576, %c0_66] : memref<1616x256xf32, #tpu.memory_space<vmem>>, vector<192x256xf32>
    %cst_67 = arith.constant dense<0.000000e+00> : vector<4x256xf32>
    %88 = tpu.matmul %86, %87, %cst_67 {dimension_numbers = #tpu.dot_dimension_numbers<[1], [0], [0], [1], [0, 0, 1, 1], [], []>} : vector<4x192xf32>, vector<192x256xf32>, vector<4x256xf32> -> vector<4x256xf32>
    %c1600 = arith.constant 1600 : index
    %c0_68 = arith.constant 0 : index
    %89 = vector.load %arg4[%c1600, %c0_68] : memref<1616x256xf32, #tpu.memory_space<vmem>>, vector<1x256xf32>
    %90 = vector.broadcast %89 : vector<1x256xf32> to vector<4x256xf32>
    %91 = arith.addf %88, %90 : vector<4x256xf32>
    %cst_69 = arith.constant 0.000000e+00 : f32
    %92 = vector.broadcast %cst_69 : f32 to vector<4x256xf32>
    %93 = arith.cmpf oge, %91, %92 : vector<4x256xf32>
    %cst_70 = arith.constant 2.000000e-01 : f32
    %94 = vector.broadcast %cst_70 : f32 to vector<4x256xf32>
    %95 = arith.mulf %94, %91 : vector<4x256xf32>
    %96 = arith.select %93, %91, %95 : vector<4x256xi1>, vector<4x256xf32>
    %97 = vector.shape_cast %96 : vector<4x256xf32> to vector<1x4x256xf32>
    %cst_71 = arith.constant dense<0.000000e+00> : vector<1xf32>
    %98 = vector.multi_reduction <add>, %97, %cst_71 [1, 2] : vector<1x4x256xf32> to vector<1xf32>
    %99 = vector.shape_cast %98 : vector<1xf32> to vector<1x1x1xf32>
    %100 = vector.extract %99[0, 0, 0] : f32 from vector<1x1x1xf32>
    %101 = vector.broadcast %100 : f32 to vector<1x1xf32>
    %102 = arith.mulf %96, %96 : vector<4x256xf32>
    %103 = vector.shape_cast %102 : vector<4x256xf32> to vector<1x4x256xf32>
    %cst_72 = arith.constant dense<0.000000e+00> : vector<1xf32>
    %104 = vector.multi_reduction <add>, %103, %cst_72 [1, 2] : vector<1x4x256xf32> to vector<1xf32>
    %105 = vector.shape_cast %104 : vector<1xf32> to vector<1x1x1xf32>
    %106 = vector.extract %105[0, 0, 0] : f32 from vector<1x1x1xf32>
    %107 = vector.broadcast %106 : f32 to vector<1x1xf32>
    %cst_73 = arith.constant 1.024000e+03 : f32
    %108 = vector.broadcast %cst_73 : f32 to vector<1x1xf32>
    %109 = arith.divf %101, %108 : vector<1x1xf32>
    %cst_74 = arith.constant 1.024000e+03 : f32
    %110 = vector.broadcast %cst_74 : f32 to vector<1x1xf32>
    %111 = arith.divf %107, %110 : vector<1x1xf32>
    %112 = arith.mulf %109, %109 : vector<1x1xf32>
    %113 = arith.subf %111, %112 : vector<1x1xf32>
    %114 = vector.broadcast %109 : vector<1x1xf32> to vector<4x256xf32>
    %115 = arith.subf %96, %114 : vector<4x256xf32>
    %cst_75 = arith.constant 9.99999974E-6 : f32
    %116 = vector.broadcast %cst_75 : f32 to vector<1x1xf32>
    %117 = arith.addf %113, %116 : vector<1x1xf32>
    %118 = math.rsqrt %117 : vector<1x1xf32>
    %119 = vector.broadcast %118 : vector<1x1xf32> to vector<4x256xf32>
    %120 = arith.mulf %115, %119 : vector<4x256xf32>
    %c8_76 = arith.constant 8 : index
    %c0_77 = arith.constant 0 : index
    %121 = vector.load %arg7[%c8_76, %c0_77] : memref<20x256xf32, #tpu.memory_space<vmem>>, vector<4x256xf32>
    tpu.vector_store %arg7[%c8_76, %c0_77], %120 {strides = array<i32>} : memref<20x256xf32, #tpu.memory_space<vmem>>, vector<4x256xf32>,
    %c7_78 = arith.constant 7 : index
    %c0_79 = arith.constant 0 : index
    %122 = vector.load %arg7[%c7_78, %c0_79] : memref<20x256xf32, #tpu.memory_space<vmem>>, vector<4x256xf32>
    %c9_80 = arith.constant 9 : index
    %c0_81 = arith.constant 0 : index
    %123 = vector.load %arg7[%c9_80, %c0_81] : memref<20x256xf32, #tpu.memory_space<vmem>>, vector<4x256xf32>
    %124 = tpu.concatenate %122, %120, %123 in 1 : vector<4x256xf32>, vector<4x256xf32>, vector<4x256xf32> -> vector<4x768xf32>
    %c768 = arith.constant 768 : index
    %c0_82 = arith.constant 0 : index
    %125 = vector.load %arg4[%c768, %c0_82] : memref<1616x256xf32, #tpu.memory_space<vmem>>, vector<768x128xf32>
    %cst_83 = arith.constant dense<0.000000e+00> : vector<4x128xf32>
    %126 = tpu.matmul %124, %125, %cst_83 {dimension_numbers = #tpu.dot_dimension_numbers<[1], [0], [0], [1], [0, 0, 1, 1], [], []>} : vector<4x768xf32>, vector<768x128xf32>, vector<4x128xf32> -> vector<4x128xf32>
    %c1608 = arith.constant 1608 : index
    %c0_84 = arith.constant 0 : index
    %127 = vector.load %arg4[%c1608, %c0_84] : memref<1616x256xf32, #tpu.memory_space<vmem>>, vector<1x128xf32>
    %128 = vector.broadcast %127 : vector<1x128xf32> to vector<4x128xf32>
    %129 = arith.addf %126, %128 : vector<4x128xf32>
    %c0_85 = arith.constant 0 : index
    %c0_86 = arith.constant 0 : index
    %c0_87 = arith.constant 0 : index
    %130 = vector.load %arg5[%c0_85, %c0_86, %c0_87] : memref<1x4x128xf32, #tpu.memory_space<vmem>>, vector<1x4x128xf32>
    %131 = vector.shape_cast %130 : vector<1x4x128xf32> to vector<4x128xf32>
    %132 = vector.shape_cast %129 : vector<4x128xf32> to vector<1x4x128xf32>
    tpu.vector_store %arg5[%c0_85, %c0_86, %c0_87], %132 {strides = array<i32>} : memref<1x4x128xf32, #tpu.memory_space<vmem>>, vector<1x4x128xf32>,
    return
  }
  func.func @transform_0(%arg0: i32) -> (i32, i32, i32) {
    %c0_i32 = arith.constant 0 : i32
    %c0_i32_0 = arith.constant 0 : i32
    %c0_i32_1 = arith.constant 0 : i32
    return %arg0, %c0_i32, %c0_i32_0 : i32, i32, i32
  }
  func.func @transform_1(%arg0: i32) -> (i32, i32, i32) {
    %c0_i32 = arith.constant 0 : i32
    %c0_i32_0 = arith.constant 0 : i32
    %c0_i32_1 = arith.constant 0 : i32
    return %arg0, %c0_i32, %c0_i32_0 : i32, i32, i32
  }
  func.func @transform_2(%arg0: i32) -> (i32, i32, i32) {
    %c0_i32 = arith.constant 0 : i32
    %c0_i32_0 = arith.constant 0 : i32
    %c0_i32_1 = arith.constant 0 : i32
    return %arg0, %c0_i32, %c0_i32_0 : i32, i32, i32
  }
  func.func @transform_3(%arg0: i32) -> (i32, i32) {
    %c0_i32 = arith.constant 0 : i32
    %c0_i32_0 = arith.constant 0 : i32
    %c0_i32_1 = arith.constant 0 : i32
    return %c0_i32, %c0_i32_0 : i32, i32
  }
  func.func @transform_4(%arg0: i32) -> (i32, i32, i32) {
    %c0_i32 = arith.constant 0 : i32
    %c0_i32_0 = arith.constant 0 : i32
    %c0_i32_1 = arith.constant 0 : i32
    return %arg0, %c0_i32, %c0_i32_0 : i32, i32, i32
  }
}

</mosaic_0001>

<llo_original>
// kernel: tpu_custom_call.1
$region0: #{tpu_custom_call.1}
  #allocation0 [shape = 'u32[]', space=smem, size = 0x4, offset = 0x4, fixed_abs, tag = 'smem constant byte address 0x4 - core index']
  #allocation1 [shape = 'u32[72,128]{1,0:T(1,128)}', space=vmem, size = 0x9000, scoped, tag = 'internal scratch']
  #allocation2 [shape = 'f32[20,64]{1,0:T(8,128)}', space=vmem, size = 0x3000, scoped, tag = 'scratch operand']
  #allocation3 [shape = 'f32[20,256]{1,0:T(8,128)}', space=vmem, size = 0x6000, scoped, tag = 'scratch operand']
  %s0 = inlined_call_operand.hbm [shape: f32[2,4,64], index: 0, kind: input, shape index: {}]
  %s1 = inlined_call_operand.hbm [shape: f32[2,4,64], index: 1, kind: input, shape index: {}]
  %s2 = inlined_call_operand.hbm [shape: f32[2,1,33], index: 2, kind: input, shape index: {}]
  %s3 = inlined_call_operand.hbm [shape: f32[1616,256], index: 3, kind: input, shape index: {}]
  %s4 = inlined_call_operand.hbm [shape: f32[2,4,128], index: 4, kind: output, shape index: {}]
  %s5 = sld [smem:[#allocation0]]
  $region65: #{tpu_custom_call.1} parent=0
    _
  %s7 = ssub.s32 1, %s5
  %s8 = scalar_select 0, %s7, %s5
  $region1: #{tpu_custom_call.1} parent=0
    #allocation4 [shape = 'u8[4096]{0}', space=vmem, size = 0x1000, scoped, tag = 'input window, operand 0']
    #allocation5 [shape = 's32[2]{0}', space=sflag, size = 0x8, scoped, tag = 'scoped memory for tpu_custom_call.1']
    #allocation6 [shape = 's32[2]{0}', space=sflag, size = 0x8, scoped, tag = 'scoped memory for tpu_custom_call.1']
    #allocation7 [shape = 'u8[4096]{0}', space=vmem, size = 0x1000, scoped, tag = 'input window, operand 1']
    #allocation8 [shape = 's32[2]{0}', space=sflag, size = 0x8, scoped, tag = 'scoped memory for tpu_custom_call.1']
    #allocation9 [shape = 'u8[1024]{0}', space=vmem, size = 0x400, scoped, tag = 'input window, operand 2']
    #allocation10 [shape = 'u8[1654784]{0}', space=vmem, size = 0x194000, scoped, tag = 'input window, operand 3, single buffered']
    #allocation11 [shape = 's32[1]{0}', space=sflag, size = 0x4, scoped, tag = 'scoped memory for tpu_custom_call.1']
    #allocation12 [shape = 'u8[4096]{0}', space=vmem, size = 0x1000, scoped, tag = 'output window, operand 0']
    %9 = vsyncpa [#allocation5], 0
    %s10 = scalar_lea.sflag [#allocation5], 1
    %11 = vsyncpa %s10, 0
    %12 = vsyncpa [#allocation8], 0
    %s13 = scalar_lea.sflag [#allocation8], 1
    %14 = vsyncpa %s13, 0
    %15 = vsyncpa [#allocation11], 0
    %16 = vsyncpa [#allocation6], 0
    %s17 = scalar_lea.sflag [#allocation6], 1
    %18 = vsyncpa %s17, 0
    loop: start=0, step=1, limit=4
    $region2: #{tpu_custom_call.1} parent=1 // loop_pre_header
      _
    $region3: #{tpu_custom_call.1} parent=1 // loop_header
      %s20 = sphi 0, %s24
      %p21 = scmp.ge.s32.totalorder %s20, 4
      %s30 = sphi 0, %s32
      %s33 = sphi 0, %s30
      %s34 = sphi 0, %s33
      %s50 = sphi 0, %s34
      %s56 = sphi 0, %s58
      %s59 = sphi 0, %s56
      %s60 = sphi 0, %s59
      %s76 = sphi 0, %s60
      %s82 = sphi 0, %s84
      %s85 = sphi 0, %s82
      %s86 = sphi 0, %s85
      %s102 = sphi 0, %s86
      %s106 = sphi 0, %s106
      %s108 = sphi 0, %s106
      %s109 = sphi 0, %s108
      %s123 = sphi 0, %s109
      %s129 = sphi 0, %s131
      %s132 = sphi 0, %s129
      %s133 = sphi 0, %s132
      %s149 = sphi 0, %s133
    $region4: #{tpu_custom_call.1} parent=1 // loop_header_branch
      %23 = sbr.rel (%p21) target = $region8
    $region5: #{tpu_custom_call.1} parent=1 // loop_body
      %s25 = ssub.s32 %s20, 1
      %s26 = ssub.s32 %s20, 2
      %s27 = sadd.s32 %s20, 1
      %s28 = ssub.s32 %s20, %s27
      %p29 = scmp.eq.s32.totalorder %s28, 0
      %s31 = sadd.s32 %s30, 1
      %s32 = scalar_select %p29, %s30, %s31
      %p35 = pneg %p29
      %p36 = scmp.eq.s32.totalorder %s20, 1
      %p37 = por %p35, %p36
      %p38 = scmp.ne.s32.totalorder %s30, %s33
      %p39 = scmp.eq.s32.totalorder %s20, 0
      %p40 = por %p38, %p39
      %p41 = scmp.ne.s32.totalorder %s30, %s33
      %p42 = scmp.eq.s32.totalorder %s25, 1
      %p43 = por %p41, %p42
      %p44 = scmp.ne.s32.totalorder %s33, %s34
      %p45 = scmp.eq.s32.totalorder %s25, 0
      %p46 = por %p44, %p45
      %p47 = scmp.ne.s32.totalorder %s33, %s34
      %p48 = scmp.eq.s32.totalorder %s26, 1
      %p49 = por %p47, %p48
      %p51 = scmp.ne.s32.totalorder %s34, %s50
      %p52 = scmp.eq.s32.totalorder %s26, 0
      %p53 = por %p51, %p52
      %s54 = ssub.s32 %s20, %s27
      %p55 = scmp.eq.s32.totalorder %s54, 0
      %s57 = sadd.s32 %s56, 1
      %s58 = scalar_select %p55, %s56, %s57
      %p61 = pneg %p55
      %p62 = scmp.eq.s32.totalorder %s20, 1
      %p63 = por %p61, %p62
      %p64 = scmp.ne.s32.totalorder %s56, %s59
      %p65 = scmp.eq.s32.totalorder %s20, 0
      %p66 = por %p64, %p65
      %p67 = scmp.ne.s32.totalorder %s56, %s59
      %p68 = scmp.eq.s32.totalorder %s25, 1
      %p69 = por %p67, %p68
      %p70 = scmp.ne.s32.totalorder %s59, %s60
      %p71 = scmp.eq.s32.totalorder %s25, 0
      %p72 = por %p70, %p71
      %p73 = scmp.ne.s32.totalorder %s59, %s60
      %p74 = scmp.eq.s32.totalorder %s26, 1
      %p75 = por %p73, %p74
      %p77 = scmp.ne.s32.totalorder %s60, %s76
      %p78 = scmp.eq.s32.totalorder %s26, 0
      %p79 = por %p77, %p78
      %s80 = ssub.s32 %s20, %s27
      %p81 = scmp.eq.s32.totalorder %s80, 0
      %s83 = sadd.s32 %s82, 1
      %s84 = scalar_select %p81, %s82, %s83
      %p87 = pneg %p81
      %p88 = scmp.eq.s32.totalorder %s20, 1
      %p89 = por %p87, %p88
      %p90 = scmp.ne.s32.totalorder %s82, %s85
      %p91 = scmp.eq.s32.totalorder %s20, 0
      %p92 = por %p90, %p91
      %p93 = scmp.ne.s32.totalorder %s82, %s85
      %p94 = scmp.eq.s32.totalorder %s25, 1
      %p95 = por %p93, %p94
      %p96 = scmp.ne.s32.totalorder %s85, %s86
      %p97 = scmp.eq.s32.totalorder %s25, 0
      %p98 = por %p96, %p97
      %p99 = scmp.ne.s32.totalorder %s85, %s86
      %p100 = scmp.eq.s32.totalorder %s26, 1
      %p101 = por %p99, %p100
      %p103 = scmp.ne.s32.totalorder %s86, %s102
      %p104 = scmp.eq.s32.totalorder %s26, 0
      %p105 = por %p103, %p104
      %s107 = sadd.s32 %s106, 1
      %p110 = scmp.eq.s32.totalorder %s20, 1
      %p111 = scmp.ne.s32.totalorder %s106, %s108
      %p112 = scmp.eq.s32.totalorder %s20, 0
      %p113 = por %p111, %p112
      %p114 = scmp.ne.s32.totalorder %s106, %s108
      %p115 = scmp.eq.s32.totalorder %s25, 1
      %p116 = por %p114, %p115
      %p117 = scmp.ne.s32.totalorder %s108, %s109
      %p118 = scmp.eq.s32.totalorder %s25, 0
      %p119 = por %p117, %p118
      %p120 = scmp.ne.s32.totalorder %s108, %s109
      %p121 = scmp.eq.s32.totalorder %s26, 1
      %p122 = por %p120, %p121
      %p124 = scmp.ne.s32.totalorder %s109, %s123
      %p125 = scmp.eq.s32.totalorder %s26, 0
      %p126 = por %p124, %p125
      %s127 = ssub.s32 %s20, %s27
      %p128 = scmp.eq.s32.totalorder %s127, 0
      %s130 = sadd.s32 %s129, 1
      %s131 = scalar_select %p128, %s129, %s130
      %p134 = pneg %p128
      %p135 = scmp.eq.s32.totalorder %s20, 1
      %p136 = por %p134, %p135
      %p137 = scmp.ne.s32.totalorder %s129, %s132
      %p138 = scmp.eq.s32.totalorder %s20, 0
      %p139 = por %p137, %p138
      %p140 = scmp.ne.s32.totalorder %s129, %s132
      %p141 = scmp.eq.s32.totalorder %s25, 1
      %p142 = por %p140, %p141
      %p143 = scmp.ne.s32.totalorder %s132, %s133
      %p144 = scmp.eq.s32.totalorder %s25, 0
      %p145 = por %p143, %p144
      %p146 = scmp.ne.s32.totalorder %s132, %s133
      %p147 = scmp.eq.s32.totalorder %s26, 1
      %p148 = por %p146, %p147
      %p150 = scmp.ne.s32.totalorder %s133, %s149
      %p151 = scmp.eq.s32.totalorder %s26, 0
      %p152 = por %p150, %p151
      %p153 = scmp.le.s32.totalorder 1, %s20
      %p154 = scmp.lt.s32.totalorder %s20, 3
      %p155 = pnand %p153, %p154
      %p156 = pneg %p155
      // Predicated region
      $region9: #{tpu_custom_call.1} parent=5 // pred_check
        _
      $region10: #{tpu_custom_call.1} parent=5 // pred_check_branch
        %158 = sbr.rel (%p155) target = $region12
      $region11: #{tpu_custom_call.1} parent=5 // pred_region
        %s159 = ssub.s32 %s20, 1
        // Predicated region
        $region13: #{tpu_custom_call.1} parent=11 // pred_check
          %p160 = pneg %p119
        $region14: #{tpu_custom_call.1} parent=11 // pred_check_branch
          %162 = sbr.rel (%p160) target = $region16
        $region15: #{tpu_custom_call.1} parent=11 // pred_region
          %164 = vsyncadd [#allocation11], 0
          %s165 = sshll.u32 %s3, 4
          %s166 = int_to_ptr.hbm [resolvable:$true] %s165
          %s167 = sshll.u32 [#allocation10], 4
          %s168 = int_to_ptr.vmem [resolvable:$true] %s167
          %173 = dma.hbm_to_vmem [thread:$0]  %s166, 51712, %s168, [#allocation11], 256, 256, 16
        $region16: #{tpu_custom_call.1} parent=11 // pred_fallthru
          _
      $region12: #{tpu_custom_call.1} parent=5 // pred_fallthru
        _
      %p174 = scmp.lt.s32.totalorder %s20, 2
      // Predicated region
      $region17: #{tpu_custom_call.1} parent=5 // pred_check
        %p175 = pneg %p174
      $region18: #{tpu_custom_call.1} parent=5 // pred_check_branch
        %177 = sbr.rel (%p175) target = $region20
      $region19: #{tpu_custom_call.1} parent=5 // pred_region
        // Predicated region
        $region21: #{tpu_custom_call.1} parent=19 // pred_check
          %p178 = pneg %p40
        $region22: #{tpu_custom_call.1} parent=19 // pred_check_branch
          %180 = sbr.rel (%p178) target = $region24
        $region23: #{tpu_custom_call.1} parent=19 // pred_region
          %s181 = sand.u32 %s30, 1
          %s182 = scalar_lea.sflag [#allocation5], %s181
          %s183 = sand.u32 %s30, 1
          %s184 = smul.addr %s183, 4
          %s185 = scalar_lea.vmem [#allocation4], %s184
          %187 = vsyncadd %s182, 0
          %s188 = smul.addr %s20, 4
          %s189 = scalar_lea.hbm %s0, %s188
          %s191 = sshll.u32 %s189, 4
          %s192 = int_to_ptr.hbm [resolvable:$true] %s191
          %s193 = sshll.u32 %s185, 4
          %s194 = int_to_ptr.vmem [resolvable:$true] %s193
          %196 = dma.hbm_to_vmem [thread:$0]  %s192, 64, %s194, %s182
        $region24: #{tpu_custom_call.1} parent=19 // pred_fallthru
          _
        // Predicated region
        $region25: #{tpu_custom_call.1} parent=19 // pred_check
          %p197 = pneg %p66
        $region26: #{tpu_custom_call.1} parent=19 // pred_check_branch
          %199 = sbr.rel (%p197) target = $region28
        $region27: #{tpu_custom_call.1} parent=19 // pred_region
          %s200 = sand.u32 %s20, 1
          %s201 = scalar_lea.sflag [#allocation8], %s200
          %s202 = sand.u32 %s56, 1
          %s203 = smul.addr %s202, 4
          %s204 = scalar_lea.vmem [#allocation7], %s203
          %206 = vsyncadd %s201, 0
          %s207 = smul.addr %s20, 4
          %s208 = scalar_lea.hbm %s1, %s207
          %s210 = sshll.u32 %s208, 4
          %s211 = int_to_ptr.hbm [resolvable:$true] %s210
          %s212 = sshll.u32 %s204, 4
          %s213 = int_to_ptr.vmem [resolvable:$true] %s212
          %215 = dma.hbm_to_vmem [thread:$0]  %s211, 64, %s213, %s201
        $region28: #{tpu_custom_call.1} parent=19 // pred_fallthru
          _
        // Predicated region
        $region29: #{tpu_custom_call.1} parent=19 // pred_check
          %p216 = pneg %p92
        $region30: #{tpu_custom_call.1} parent=19 // pred_check_branch
          %218 = sbr.rel (%p216) target = $region32
        $region31: #{tpu_custom_call.1} parent=19 // pred_region
          %s219 = sand.u32 %s20, 1
          %s220 = scalar_lea.sflag [#allocation8], %s219
          %s221 = sand.u32 %s82, 1
          %s222 = scalar_lea.vmem [#allocation9], %s221
          %224 = vsyncadd %s220, 0
          %s225 = scalar_lea.hbm %s2, %s20
          %s227 = sshll.u32 %s225, 4
          %s228 = int_to_ptr.hbm [resolvable:$true] %s227
          %s229 = sshll.u32 %s222, 4
          %s230 = int_to_ptr.vmem [resolvable:$true] %s229
          %232 = dma.hbm_to_vmem [thread:$0]  %s228, 16, %s230, %s220
        $region32: #{tpu_custom_call.1} parent=19 // pred_fallthru
          _
      $region20: #{tpu_custom_call.1} parent=5 // pred_fallthru
        _
      %p233 = scmp.le.s32.totalorder 1, %s20
      %p234 = scmp.lt.s32.totalorder %s20, 3
      %p235 = pnand %p233, %p234
      %p236 = pneg %p235
      // Predicated region
      $region33: #{tpu_custom_call.1} parent=5 // pred_check
        _
      $region34: #{tpu_custom_call.1} parent=5 // pred_check_branch
        %238 = sbr.rel (%p235) target = $region36
      $region35: #{tpu_custom_call.1} parent=5 // pred_region
        %s239 = ssub.s32 %s20, 1
        %s240 = sand.u32 %s33, 1
        %s241 = scalar_lea.sflag [#allocation5], %s240
        %s242 = sand.u32 %s33, 1
        %s243 = smul.addr %s242, 4
        %s244 = scalar_lea.vmem [#allocation4], %s243
        // Predicated region
        $region37: #{tpu_custom_call.1} parent=35 // pred_check
          %p245 = pneg %p46
        $region38: #{tpu_custom_call.1} parent=35 // pred_check_branch
          %247 = sbr.rel (%p245) target = $region40
        $region39: #{tpu_custom_call.1} parent=35 // pred_region
          %249 = dma.done %s241, 64
        $region40: #{tpu_custom_call.1} parent=35 // pred_fallthru
          _
        %s250 = sand.u32 %s25, 1
        %s251 = scalar_lea.sflag [#allocation8], %s250
        %s252 = sand.u32 %s59, 1
        %s253 = smul.addr %s252, 4
        %s254 = scalar_lea.vmem [#allocation7], %s253
        // Predicated region
        $region41: #{tpu_custom_call.1} parent=35 // pred_check
          %p255 = pneg %p72
        $region42: #{tpu_custom_call.1} parent=35 // pred_check_branch
          %257 = sbr.rel (%p255) target = $region44
        $region43: #{tpu_custom_call.1} parent=35 // pred_region
          %259 = dma.done %s251, 64
        $region44: #{tpu_custom_call.1} parent=35 // pred_fallthru
          _
        %s260 = sand.u32 %s25, 1
        %s261 = scalar_lea.sflag [#allocation8], %s260
        %s262 = sand.u32 %s85, 1
        %s263 = scalar_lea.vmem [#allocation9], %s262
        // Predicated region
        $region45: #{tpu_custom_call.1} parent=35 // pred_check
          %p264 = pneg %p98
        $region46: #{tpu_custom_call.1} parent=35 // pred_check_branch
          %266 = sbr.rel (%p264) target = $region48
        $region47: #{tpu_custom_call.1} parent=35 // pred_region
          %268 = dma.done %s261, 16
        $region48: #{tpu_custom_call.1} parent=35 // pred_fallthru
          _
        // Predicated region
        $region49: #{tpu_custom_call.1} parent=35 // pred_check
          %p269 = pneg %p119
        $region50: #{tpu_custom_call.1} parent=35 // pred_check_branch
          %271 = sbr.rel (%p269) target = $region52
        $region51: #{tpu_custom_call.1} parent=35 // pred_region
          %273 = dma.done [#allocation11], 51712
        $region52: #{tpu_custom_call.1} parent=35 // pred_fallthru
          _
        %s274 = sand.u32 %s33, 1
        %s275 = scalar_lea.sflag [#allocation5], %s274
        %s276 = sand.u32 %s33, 1
        %s277 = smul.addr %s276, 4
        %s278 = scalar_lea.vmem [#allocation4], %s277
        %p279 = pneg %p46
        %p280 = pneg %p43
        %s281 = sand.u32 %s25, 1
        %s282 = scalar_lea.sflag [#allocation8], %s281
        %s283 = sand.u32 %s59, 1
        %s284 = smul.addr %s283, 4
        %s285 = scalar_lea.vmem [#allocation7], %s284
        %p286 = pneg %p72
        %p287 = pneg %p69
        %s288 = sand.u32 %s25, 1
        %s289 = scalar_lea.sflag [#allocation8], %s288
        %s290 = sand.u32 %s85, 1
        %s291 = scalar_lea.vmem [#allocation9], %s290
        %p292 = pneg %p98
        %p293 = pneg %p95
        %p294 = pneg %p119
        %p295 = pneg %p116
        %p296 = pneg %p145
        %p297 = pneg %p142
        %s298 = sand.u32 %s132, 1
        %s299 = scalar_lea.sflag [#allocation6], %s298
        %s300 = sand.u32 %s132, 1
        %s301 = smul.addr %s300, 4
        %s302 = scalar_lea.vmem [#allocation12], %s301
        %vm303 = vcmask 516096
        %304 = vst.msk [vmem:[#allocation2 + $0x7] sm:$0x1] %vm303, 0.0
        %305 = vst.msk [vmem:[#allocation2 + $0xc] sm:$0x1] %vm303, 0.0
        %v306 = vlaneseq
        %vm307 = vcmp.ge.s32.totalorder %v306, 0
        %vm308 = vcmp.lt.s32.totalorder %v306, 256
        %vm309 = vmand %vm307, %vm308
        %s310 = scalar_lea.vmem [#allocation3], 7
        %311 = vst.msk [vmem:[%s310] ss:$8 sm:$0x3] %vm309, 0.0
        %312 = vst.msk [vmem:[%s310] ss:$8 sm:$0x0] %vm309, 0.0
        %s313 = scalar_lea.vmem [#allocation3], 20
        %314 = vst.msk [vmem:[%s313] ss:$8 sm:$0x3] %vm309, 0.0
        %315 = vst.msk [vmem:[%s313] ss:$8 sm:$0x0] %vm309, 0.0
        %v316 = vld [vmem:[%s244] sm:$0xf]
        %v317 = vld [vmem:[%s254] sm:$0xf]
        %v318 = vadd.f32 %v316, %v317
        %vm319 = vcmask 519168
        %320 = vst.msk [vmem:[#allocation2 + $0x8] sm:$0xf] %vm319, %v318
        %v321 = vld [vmem:[#allocation2 + $0x7] sm:$0xf]
        %v322 = vld [vmem:[#allocation2 + $0x9] sm:$0xf]
        %324 = vrot.lane.b32.xlu0 %v318, 64
        %v325 = vpop.permute.xlu0 %324
        %vm327 = vcmask 523264
        %v328 = vsel %vm327, %v321, %v325
        %v329 = vld [vmem:[%s263] sm:$0x1]
        %v330 = vld [vmem:[#allocation10 + $0xc00] sm:$0xff]
        %v331 = vld [vmem:[#allocation10 + $0xc08] sm:$0xff]
        %v332 = vld [vmem:[#allocation10 + $0xc10] sm:$0xff]
        %v333 = vld [vmem:[#allocation10 + $0xc18] sm:$0xff]
        %v334 = vld [vmem:[#allocation10 + $0xc20] sm:$0xff]
        %v335 = vld [vmem:[#allocation10 + $0xc28] sm:$0xff]
        %v336 = vld [vmem:[#allocation10 + $0xc30] sm:$0xff]
        %v337 = vld [vmem:[#allocation10 + $0xc38] sm:$0xff]
        %v338 = vld [vmem:[#allocation10 + $0xc40] sm:$0x1]
        %v339 = vld [vmem:[#allocation10 + $0xc48] sm:$0x1]
        %vm340 = vcmask 269312
        %v342 = vsel %vm340, %v329, 0
        %vm344 = vcmask 1040384
        %v346 = vsel %vm344, %v338, 0
        %v349 = vsel %vm344, %v339, 0
        %351 = vmatpush.msra.mxu0 0.0
        %352 = vmatpush.msra.mxu0 0.0
        %353 = vmatpush.msra.mxu0 0.0
        %354 = vmatpush.msra.mxu0 0.0
        %355 = vmatpush.msra.mxu0 0.0
        %356 = vmatpush.msra.mxu0 0.0
        %357 = vmatpush.msra.mxu0 0.0
        %358 = vmatpush.msra.mxu0 0.0
        %359 = vmatpush.msra.mxu0 0.0
        %360 = vmatpush.msra.mxu0 0.0
        %361 = vmatpush.msra.mxu0 0.0
        %362 = vmatpush.msra.mxu0 %v346
        %363 = vmatpush.msra.mxu0 %v336
        %364 = vmatpush.msra.mxu0 %v334
        %365 = vmatpush.msra.mxu0 %v332
        %366 = vmatpush.msra.mxu0 %v330
        %367 = vmatmul.f32.gmra.mxu0 %v342
        %v368 = vpop.f32.mrf.mxu0
        %v369 = vadd.f32 0.0, %v368
        %370 = vdwg.mxu0
        %371 = vmatpush.msra.mxu0 0.0
        %372 = vmatpush.msra.mxu0 0.0
        %373 = vmatpush.msra.mxu0 0.0
        %374 = vmatpush.msra.mxu0 0.0
        %375 = vmatpush.msra.mxu0 0.0
        %376 = vmatpush.msra.mxu0 0.0
        %377 = vmatpush.msra.mxu0 0.0
        %378 = vmatpush.msra.mxu0 0.0
        %379 = vmatpush.msra.mxu0 0.0
        %380 = vmatpush.msra.mxu0 0.0
        %381 = vmatpush.msra.mxu0 0.0
        %382 = vmatpush.msra.mxu0 %v349
        %383 = vmatpush.msra.mxu0 %v337
        %384 = vmatpush.msra.mxu0 %v335
        %385 = vmatpush.msra.mxu0 %v333
        %386 = vmatpush.msra.mxu0 %v331
        %387 = vmatmul.f32.gmra.mxu0 %v342
        %v388 = vpop.f32.mrf.mxu0
        %v389 = vadd.f32 0.0, %v388
        %390 = vdwg.mxu0
        %v391 = vld [vmem:[#allocation10] sm:$0xff]
        %v392 = vld [vmem:[#allocation10 + $0x10] sm:$0xff]
        %v393 = vld [vmem:[#allocation10 + $0x20] sm:$0xff]
        %v394 = vld [vmem:[#allocation10 + $0x30] sm:$0xff]
        %v395 = vld [vmem:[#allocation10 + $0x40] sm:$0xff]
        %v396 = vld [vmem:[#allocation10 + $0x50] sm:$0xff]
        %v397 = vld [vmem:[#allocation10 + $0x60] sm:$0xff]
        %v398 = vld [vmem:[#allocation10 + $0x70] sm:$0xff]
        %v399 = vld [vmem:[#allocation10 + $0x80] sm:$0xff]
        %v400 = vld [vmem:[#allocation10 + $0x90] sm:$0xff]
        %v401 = vld [vmem:[#allocation10 + $0xa0] sm:$0xff]
        %v402 = vld [vmem:[#allocation10 + $0xb0] sm:$0xff]
        %v403 = vld [vmem:[#allocation10 + $0xc0] sm:$0xff]
        %v404 = vld [vmem:[#allocation10 + $0xd0] sm:$0xff]
        %v405 = vld [vmem:[#allocation10 + $0xe0] sm:$0xff]
        %v406 = vld [vmem:[#allocation10 + $0xf0] sm:$0xff]
        %v407 = vld [vmem:[#allocation10 + $0x100] sm:$0xff]
        %v408 = vld [vmem:[#allocation10 + $0x110] sm:$0xff]
        %v409 = vld [vmem:[#allocation10 + $0x120] sm:$0xff]
        %v410 = vld [vmem:[#allocation10 + $0x130] sm:$0xff]
        %v411 = vld [vmem:[#allocation10 + $0x140] sm:$0xff]
        %v412 = vld [vmem:[#allocation10 + $0x150] sm:$0xff]
        %v413 = vld [vmem:[#allocation10 + $0x160] sm:$0xff]
        %v414 = vld [vmem:[#allocation10 + $0x170] sm:$0xff]
        %v415 = vperm.slane %v369, 0
        %v417 = vsel %vm327, %v322, 0
        %419 = vmatpush.msra.mxu0 %v406
        %420 = vmatpush.msra.mxu0 %v405
        %421 = vmatpush.msra.mxu0 %v404
        %422 = vmatpush.msra.mxu0 %v403
        %423 = vmatpush.msra.mxu0 %v402
        %424 = vmatpush.msra.mxu0 %v401
        %425 = vmatpush.msra.mxu0 %v400
        %426 = vmatpush.msra.mxu0 %v399
        %427 = vmatpush.msra.mxu0 %v398
        %428 = vmatpush.msra.mxu0 %v397
        %429 = vmatpush.msra.mxu0 %v396
        %430 = vmatpush.msra.mxu0 %v395
        %431 = vmatpush.msra.mxu0 %v394
        %432 = vmatpush.msra.mxu0 %v393
        %433 = vmatpush.msra.mxu0 %v392
        %434 = vmatpush.msra.mxu0 %v391
        %435 = vmatmul.f32.gmra.mxu0 %v328
        %v436 = vpop.f32.mrf.mxu0
        %v437 = vadd.f32 %v415, %v436
        %438 = vdwg.mxu0
        %439 = vmatpush.msra.mxu0 0.0
        %440 = vmatpush.msra.mxu0 0.0
        %441 = vmatpush.msra.mxu0 0.0
        %442 = vmatpush.msra.mxu0 0.0
        %443 = vmatpush.msra.mxu0 0.0
        %444 = vmatpush.msra.mxu0 0.0
        %445 = vmatpush.msra.mxu0 0.0
        %446 = vmatpush.msra.mxu0 0.0
        %447 = vmatpush.msra.mxu0 %v414
        %448 = vmatpush.msra.mxu0 %v413
        %449 = vmatpush.msra.mxu0 %v412
        %450 = vmatpush.msra.mxu0 %v411
        %451 = vmatpush.msra.mxu0 %v410
        %452 = vmatpush.msra.mxu0 %v409
        %453 = vmatpush.msra.mxu0 %v408
        %454 = vmatpush.msra.mxu0 %v407
        %455 = vmatmul.f32.gmra.mxu0 %v417
        %v456 = vpop.f32.mrf.mxu0
        %v457 = vadd.f32 %v437, %v456
        %458 = vdwg.mxu0
        %v459 = vld [vmem:[#allocation10 + $0xc50] ss:$0 sm:$0xff]
        %v460 = vadd.f32 %v457, %v459
        %vm461 = vcmp.ge.f32.partialorder %v460, 0.0
        %v462 = vmul.f32 %v460, 0.2
        %v463 = vsel %vm461, %v460, %v462
        %464 = vst.msk [vmem:[#allocation2 + $0x8] sm:$0xf] %vm319, %v463
        %466 = vrot.lane.b32.xlu0 %v369, 64
        %v467 = vpop.permute.xlu0 %466
        %v469 = vsub.f32 %v460, %v467
        %vm470 = vcmp.ge.f32.partialorder %v469, 0.0
        %v471 = vmul.f32 %v469, 0.2
        %v472 = vsel %vm470, %v469, %v471
        %473 = vst.msk [vmem:[#allocation2 + $0x8] sm:$0x1] %vm303, %v472
        %v475 = vrot.slane %v389, 5
        %v477 = vsub.f32 %v460, %v475
        %vm478 = vcmp.ge.f32.partialorder %v477, 0.0
        %v479 = vmul.f32 %v477, 0.2
        %v480 = vsel %vm478, %v477, %v479
        %vm481 = vcmask 519171
        %482 = vst.msk [vmem:[#allocation2 + $0x8] sm:$0x8] %vm481, %v480
        %v483 = vld [vmem:[#allocation2 + $0x7] sm:$0xf]
        %v484 = vld [vmem:[#allocation2 + $0x8] sm:$0xf]
        %v485 = vld [vmem:[#allocation2 + $0x9] sm:$0xf]
        %487 = vrot.lane.b32.xlu0 %v484, 64
        %v488 = vpop.permute.xlu0 %487
        %v490 = vsel %vm327, %v483, %v488
        %v491 = vld [vmem:[#allocation10 + $0x180] sm:$0xff]
        %v492 = vld [vmem:[#allocation10 + $0x190] sm:$0xff]
        %v493 = vld [vmem:[#allocation10 + $0x1a0] sm:$0xff]
        %v494 = vld [vmem:[#allocation10 + $0x1b0] sm:$0xff]
        %v495 = vld [vmem:[#allocation10 + $0x1c0] sm:$0xff]
        %v496 = vld [vmem:[#allocation10 + $0x1d0] sm:$0xff]
        %v497 = vld [vmem:[#allocation10 + $0x1e0] sm:$0xff]
        %v498 = vld [vmem:[#allocation10 + $0x1f0] sm:$0xff]
        %v499 = vld [vmem:[#allocation10 + $0x200] sm:$0xff]
        %v500 = vld [vmem:[#allocation10 + $0x210] sm:$0xff]
        %v501 = vld [vmem:[#allocation10 + $0x220] sm:$0xff]
        %v502 = vld [vmem:[#allocation10 + $0x230] sm:$0xff]
        %v503 = vld [vmem:[#allocation10 + $0x240] sm:$0xff]
        %v504 = vld [vmem:[#allocation10 + $0x250] sm:$0xff]
        %v505 = vld [vmem:[#allocation10 + $0x260] sm:$0xff]
        %v506 = vld [vmem:[#allocation10 + $0x270] sm:$0xff]
        %v507 = vld [vmem:[#allocation10 + $0x280] sm:$0xff]
        %v508 = vld [vmem:[#allocation10 + $0x290] sm:$0xff]
        %v509 = vld [vmem:[#allocation10 + $0x2a0] sm:$0xff]
        %v510 = vld [vmem:[#allocation10 + $0x2b0] sm:$0xff]
        %v511 = vld [vmem:[#allocation10 + $0x2c0] sm:$0xff]
        %v512 = vld [vmem:[#allocation10 + $0x2d0] sm:$0xff]
        %v513 = vld [vmem:[#allocation10 + $0x2e0] sm:$0xff]
        %v514 = vld [vmem:[#allocation10 + $0x2f0] sm:$0xff]
        %v515 = vld [vmem:[#allocation10 + $0xc60] ss:$0 sm:$0xff]
        %v517 = vsel %vm327, %v485, 0
        %519 = vmatpush.msra.mxu0 %v506
        %520 = vmatpush.msra.mxu0 %v505
        %521 = vmatpush.msra.mxu0 %v504
        %522 = vmatpush.msra.mxu0 %v503
        %523 = vmatpush.msra.mxu0 %v502
        %524 = vmatpush.msra.mxu0 %v501
        %525 = vmatpush.msra.mxu0 %v500
        %526 = vmatpush.msra.mxu0 %v499
        %527 = vmatpush.msra.mxu0 %v498
        %528 = vmatpush.msra.mxu0 %v497
        %529 = vmatpush.msra.mxu0 %v496
        %530 = vmatpush.msra.mxu0 %v495
        %531 = vmatpush.msra.mxu0 %v494
        %532 = vmatpush.msra.mxu0 %v493
        %533 = vmatpush.msra.mxu0 %v492
        %534 = vmatpush.msra.mxu0 %v491
        %535 = vmatmul.f32.gmra.mxu0 %v490
        %v536 = vpop.f32.mrf.mxu0
        %v537 = vadd.f32 %v515, %v536
        %538 = vdwg.mxu0
        %539 = vmatpush.msra.mxu0 0.0
        %540 = vmatpush.msra.mxu0 0.0
        %541 = vmatpush.msra.mxu0 0.0
        %542 = vmatpush.msra.mxu0 0.0
        %543 = vmatpush.msra.mxu0 0.0
        %544 = vmatpush.msra.mxu0 0.0
        %545 = vmatpush.msra.mxu0 0.0
        %546 = vmatpush.msra.mxu0 0.0
        %547 = vmatpush.msra.mxu0 %v514
        %548 = vmatpush.msra.mxu0 %v513
        %549 = vmatpush.msra.mxu0 %v512
        %550 = vmatpush.msra.mxu0 %v511
        %551 = vmatpush.msra.mxu0 %v510
        %552 = vmatpush.msra.mxu0 %v509
        %553 = vmatpush.msra.mxu0 %v508
        %554 = vmatpush.msra.mxu0 %v507
        %555 = vmatmul.f32.gmra.mxu0 %v517
        %v556 = vpop.f32.mrf.mxu0
        %v557 = vadd.f32 %v537, %v556
        %558 = vdwg.mxu0
        %v559 = vadd.f32 %v557, %v484
        %vm560 = vcmp.ge.f32.partialorder %v559, 0.0
        %v561 = vmul.f32 %v559, 0.2
        %v562 = vsel %vm560, %v559, %v561
        %563 = vst.msk [vmem:[#allocation2 + $0x8] sm:$0xf] %vm319, %v562
        %v564 = vld [vmem:[#allocation2 + $0x7] sm:$0xf]
        %v565 = vld [vmem:[#allocation2 + $0x9] sm:$0xf]
        %567 = vrot.lane.b32.xlu0 %v562, 64
        %v568 = vpop.permute.xlu0 %567
        %v570 = vsel %vm327, %v564, %v568
        %v571 = vld [vmem:[#allocation10 + $0x300] sm:$0xff]
        %v572 = vld [vmem:[#allocation10 + $0x310] sm:$0xff]
        %v573 = vld [vmem:[#allocation10 + $0x320] sm:$0xff]
        %v574 = vld [vmem:[#allocation10 + $0x330] sm:$0xff]
        %v575 = vld [vmem:[#allocation10 + $0x340] sm:$0xff]
        %v576 = vld [vmem:[#allocation10 + $0x350] sm:$0xff]
        %v577 = vld [vmem:[#allocation10 + $0x360] sm:$0xff]
        %v578 = vld [vmem:[#allocation10 + $0x370] sm:$0xff]
        %v579 = vld [vmem:[#allocation10 + $0x380] sm:$0xff]
        %v580 = vld [vmem:[#allocation10 + $0x390] sm:$0xff]
        %v581 = vld [vmem:[#allocation10 + $0x3a0] sm:$0xff]
        %v582 = vld [vmem:[#allocation10 + $0x3b0] sm:$0xff]
        %v583 = vld [vmem:[#allocation10 + $0x3c0] sm:$0xff]
        %v584 = vld [vmem:[#allocation10 + $0x3d0] sm:$0xff]
        %v585 = vld [vmem:[#allocation10 + $0x3e0] sm:$0xff]
        %v586 = vld [vmem:[#allocation10 + $0x3f0] sm:$0xff]
        %v587 = vld [vmem:[#allocation10 + $0x400] sm:$0xff]
        %v588 = vld [vmem:[#allocation10 + $0x410] sm:$0xff]
        %v589 = vld [vmem:[#allocation10 + $0x420] sm:$0xff]
        %v590 = vld [vmem:[#allocation10 + $0x430] sm:$0xff]
        %v591 = vld [vmem:[#allocation10 + $0x440] sm:$0xff]
        %v592 = vld [vmem:[#allocation10 + $0x450] sm:$0xff]
        %v593 = vld [vmem:[#allocation10 + $0x460] sm:$0xff]
        %v594 = vld [vmem:[#allocation10 + $0x470] sm:$0xff]
        %v595 = vld [vmem:[#allocation10 + $0xc70] ss:$0 sm:$0xff]
        %v597 = vsel %vm327, %v565, 0
        %599 = vmatpush.msra.mxu0 %v586
        %600 = vmatpush.msra.mxu0 %v585
        %601 = vmatpush.msra.mxu0 %v584
        %602 = vmatpush.msra.mxu0 %v583
        %603 = vmatpush.msra.mxu0 %v582
        %604 = vmatpush.msra.mxu0 %v581
        %605 = vmatpush.msra.mxu0 %v580
        %606 = vmatpush.msra.mxu0 %v579
        %607 = vmatpush.msra.mxu0 %v578
        %608 = vmatpush.msra.mxu0 %v577
        %609 = vmatpush.msra.mxu0 %v576
        %610 = vmatpush.msra.mxu0 %v575
        %611 = vmatpush.msra.mxu0 %v574
        %612 = vmatpush.msra.mxu0 %v573
        %613 = vmatpush.msra.mxu0 %v572
        %614 = vmatpush.msra.mxu0 %v571
        %615 = vmatmul.f32.gmra.mxu0 %v570
        %v616 = vpop.f32.mrf.mxu0
        %v617 = vadd.f32 %v595, %v616
        %618 = vdwg.mxu0
        %619 = vmatpush.msra.mxu0 0.0
        %620 = vmatpush.msra.mxu0 0.0
        %621 = vmatpush.msra.mxu0 0.0
        %622 = vmatpush.msra.mxu0 0.0
        %623 = vmatpush.msra.mxu0 0.0
        %624 = vmatpush.msra.mxu0 0.0
        %625 = vmatpush.msra.mxu0 0.0
        %626 = vmatpush.msra.mxu0 0.0
        %627 = vmatpush.msra.mxu0 %v594
        %628 = vmatpush.msra.mxu0 %v593
        %629 = vmatpush.msra.mxu0 %v592
        %630 = vmatpush.msra.mxu0 %v591
        %631 = vmatpush.msra.mxu0 %v590
        %632 = vmatpush.msra.mxu0 %v589
        %633 = vmatpush.msra.mxu0 %v588
        %634 = vmatpush.msra.mxu0 %v587
        %635 = vmatmul.f32.gmra.mxu0 %v597
        %v636 = vpop.f32.mrf.mxu0
        %v637 = vadd.f32 %v617, %v636
        %638 = vdwg.mxu0
        %v639 = vadd.f32 %v637, %v562
        %vm640 = vcmp.ge.f32.partialorder %v639, 0.0
        %v641 = vmul.f32 %v639, 0.2
        %v642 = vsel %vm640, %v639, %v641
        %643 = vst.msk [vmem:[#allocation2 + $0x8] sm:$0xf] %vm319, %v642
        %v644 = vld [vmem:[#allocation2 + $0x7] sm:$0xf]
        %v645 = vld [vmem:[#allocation2 + $0x9] sm:$0xf]
        %647 = vrot.lane.b32.xlu0 %v642, 64
        %v648 = vpop.permute.xlu0 %647
        %v650 = vsel %vm327, %v644, %v648
        %v651 = vld [vmem:[#allocation10 + $0x480] sm:$0xff]
        %v652 = vld [vmem:[#allocation10 + $0x488] sm:$0xff]
        %v653 = vld [vmem:[#allocation10 + $0x490] sm:$0xff]
        %v654 = vld [vmem:[#allocation10 + $0x498] sm:$0xff]
        %v655 = vld [vmem:[#allocation10 + $0x4a0] sm:$0xff]
        %v656 = vld [vmem:[#allocation10 + $0x4a8] sm:$0xff]
        %v657 = vld [vmem:[#allocation10 + $0x4b0] sm:$0xff]
        %v658 = vld [vmem:[#allocation10 + $0x4b8] sm:$0xff]
        %v659 = vld [vmem:[#allocation10 + $0x4c0] sm:$0xff]
        %v660 = vld [vmem:[#allocation10 + $0x4c8] sm:$0xff]
        %v661 = vld [vmem:[#allocation10 + $0x4d0] sm:$0xff]
        %v662 = vld [vmem:[#allocation10 + $0x4d8] sm:$0xff]
        %v663 = vld [vmem:[#allocation10 + $0x4e0] sm:$0xff]
        %v664 = vld [vmem:[#allocation10 + $0x4e8] sm:$0xff]
        %v665 = vld [vmem:[#allocation10 + $0x4f0] sm:$0xff]
        %v666 = vld [vmem:[#allocation10 + $0x4f8] sm:$0xff]
        %v667 = vld [vmem:[#allocation10 + $0x500] sm:$0xff]
        %v668 = vld [vmem:[#allocation10 + $0x508] sm:$0xff]
        %v669 = vld [vmem:[#allocation10 + $0x510] sm:$0xff]
        %v670 = vld [vmem:[#allocation10 + $0x518] sm:$0xff]
        %v671 = vld [vmem:[#allocation10 + $0x520] sm:$0xff]
        %v672 = vld [vmem:[#allocation10 + $0x528] sm:$0xff]
        %v673 = vld [vmem:[#allocation10 + $0x530] sm:$0xff]
        %v674 = vld [vmem:[#allocation10 + $0x538] sm:$0xff]
        %v675 = vld [vmem:[#allocation10 + $0x540] sm:$0xff]
        %v676 = vld [vmem:[#allocation10 + $0x548] sm:$0xff]
        %v677 = vld [vmem:[#allocation10 + $0x550] sm:$0xff]
        %v678 = vld [vmem:[#allocation10 + $0x558] sm:$0xff]
        %v679 = vld [vmem:[#allocation10 + $0x560] sm:$0xff]
        %v680 = vld [vmem:[#allocation10 + $0x568] sm:$0xff]
        %v681 = vld [vmem:[#allocation10 + $0x570] sm:$0xff]
        %v682 = vld [vmem:[#allocation10 + $0x578] sm:$0xff]
        %v683 = vld [vmem:[#allocation10 + $0x580] sm:$0xff]
        %v684 = vld [vmem:[#allocation10 + $0x588] sm:$0xff]
        %v685 = vld [vmem:[#allocation10 + $0x590] sm:$0xff]
        %v686 = vld [vmem:[#allocation10 + $0x598] sm:$0xff]
        %v687 = vld [vmem:[#allocation10 + $0x5a0] sm:$0xff]
        %v688 = vld [vmem:[#allocation10 + $0x5a8] sm:$0xff]
        %v689 = vld [vmem:[#allocation10 + $0x5b0] sm:$0xff]
        %v690 = vld [vmem:[#allocation10 + $0x5b8] sm:$0xff]
        %v691 = vld [vmem:[#allocation10 + $0x5c0] sm:$0xff]
        %v692 = vld [vmem:[#allocation10 + $0x5c8] sm:$0xff]
        %v693 = vld [vmem:[#allocation10 + $0x5d0] sm:$0xff]
        %v694 = vld [vmem:[#allocation10 + $0x5d8] sm:$0xff]
        %v695 = vld [vmem:[#allocation10 + $0x5e0] sm:$0xff]
        %v696 = vld [vmem:[#allocation10 + $0x5e8] sm:$0xff]
        %v697 = vld [vmem:[#allocation10 + $0x5f0] sm:$0xff]
        %v698 = vld [vmem:[#allocation10 + $0x5f8] sm:$0xff]
        %s699 = scalar_lea.vmem [#allocation10], 3200
        %v700 = vld [vmem:[%s699] ss:$8 sm:$0x3]
        %v702 = vperm.slane %v700, 0
        %v703 = vperm.slane %v700, 1
        %v707 = vsel %vm327, %v645, 0
        %709 = vmatpush.msra.mxu0 %v681
        %710 = vmatpush.msra.mxu0 %v679
        %711 = vmatpush.msra.mxu0 %v677
        %712 = vmatpush.msra.mxu0 %v675
        %713 = vmatpush.msra.mxu0 %v673
        %714 = vmatpush.msra.mxu0 %v671
        %715 = vmatpush.msra.mxu0 %v669
        %716 = vmatpush.msra.mxu0 %v667
        %717 = vmatpush.msra.mxu0 %v665
        %718 = vmatpush.msra.mxu0 %v663
        %719 = vmatpush.msra.mxu0 %v661
        %720 = vmatpush.msra.mxu0 %v659
        %721 = vmatpush.msra.mxu0 %v657
        %722 = vmatpush.msra.mxu0 %v655
        %723 = vmatpush.msra.mxu0 %v653
        %724 = vmatpush.msra.mxu0 %v651
        %725 = vmatmul.f32.gmra.mxu0 %v650
        %v726 = vpop.f32.mrf.mxu0
        %v727 = vadd.f32 %v702, %v726
        %728 = vdwg.mxu0
        %729 = vmatpush.msra.mxu0 0.0
        %730 = vmatpush.msra.mxu0 0.0
        %731 = vmatpush.msra.mxu0 0.0
        %732 = vmatpush.msra.mxu0 0.0
        %733 = vmatpush.msra.mxu0 0.0
        %734 = vmatpush.msra.mxu0 0.0
        %735 = vmatpush.msra.mxu0 0.0
        %736 = vmatpush.msra.mxu0 0.0
        %737 = vmatpush.msra.mxu0 %v697
        %738 = vmatpush.msra.mxu0 %v695
        %739 = vmatpush.msra.mxu0 %v693
        %740 = vmatpush.msra.mxu0 %v691
        %741 = vmatpush.msra.mxu0 %v689
        %742 = vmatpush.msra.mxu0 %v687
        %743 = vmatpush.msra.mxu0 %v685
        %744 = vmatpush.msra.mxu0 %v683
        %745 = vmatmul.f32.gmra.mxu0 %v707
        %v746 = vpop.f32.mrf.mxu0
        %v747 = vadd.f32 %v727, %v746
        %748 = vdwg.mxu0
        %749 = vmatpush.msra.mxu0 %v682
        %750 = vmatpush.msra.mxu0 %v680
        %751 = vmatpush.msra.mxu0 %v678
        %752 = vmatpush.msra.mxu0 %v676
        %753 = vmatpush.msra.mxu0 %v674
        %754 = vmatpush.msra.mxu0 %v672
        %755 = vmatpush.msra.mxu0 %v670
        %756 = vmatpush.msra.mxu0 %v668
        %757 = vmatpush.msra.mxu0 %v666
        %758 = vmatpush.msra.mxu0 %v664
        %759 = vmatpush.msra.mxu0 %v662
        %760 = vmatpush.msra.mxu0 %v660
        %761 = vmatpush.msra.mxu0 %v658
        %762 = vmatpush.msra.mxu0 %v656
        %763 = vmatpush.msra.mxu0 %v654
        %764 = vmatpush.msra.mxu0 %v652
        %765 = vmatmul.f32.gmra.mxu0 %v650
        %v766 = vpop.f32.mrf.mxu0
        %v767 = vadd.f32 %v703, %v766
        %768 = vdwg.mxu0
        %769 = vmatpush.msra.mxu0 0.0
        %770 = vmatpush.msra.mxu0 0.0
        %771 = vmatpush.msra.mxu0 0.0
        %772 = vmatpush.msra.mxu0 0.0
        %773 = vmatpush.msra.mxu0 0.0
        %774 = vmatpush.msra.mxu0 0.0
        %775 = vmatpush.msra.mxu0 0.0
        %776 = vmatpush.msra.mxu0 0.0
        %777 = vmatpush.msra.mxu0 %v698
        %778 = vmatpush.msra.mxu0 %v696
        %779 = vmatpush.msra.mxu0 %v694
        %780 = vmatpush.msra.mxu0 %v692
        %781 = vmatpush.msra.mxu0 %v690
        %782 = vmatpush.msra.mxu0 %v688
        %783 = vmatpush.msra.mxu0 %v686
        %784 = vmatpush.msra.mxu0 %v684
        %785 = vmatmul.f32.gmra.mxu0 %v707
        %v786 = vpop.f32.mrf.mxu0
        %v787 = vadd.f32 %v767, %v786
        %788 = vdwg.mxu0
        %vm789 = vcmp.ge.f32.partialorder %v747, 0.0
        %vm790 = vcmp.ge.f32.partialorder %v787, 0.0
        %v791 = vmul.f32 %v747, 0.2
        %v792 = vmul.f32 %v787, 0.2
        %v793 = vsel %vm789, %v747, %v791
        %v794 = vsel %vm790, %v787, %v792
        %vm795 = vcmask 1043456
        %v796 = vsel %vm795, %v793, 0.0
        %v797 = vsel %vm795, %v794, 0.0
        %v798 = vadd.f32 %v796, %v797
        %799 = vadd.xlane.f32.xlu0 %v798
        %v800 = vpop.xlane.xlu0 %799
        %v801 = vrot.slane %v800, 4
        %v802 = vadd.f32 %v800, %v801
        %v803 = vrot.slane %v802, 2
        %v804 = vadd.f32 %v802, %v803
        %v805 = vrot.slane %v804, 1
        %v806 = vadd.f32 %v804, %v805
        %s807 = vtos %v806
        %v808 = vstv %s807
        %v809 = vmul.f32 %v793, %v793
        %v810 = vmul.f32 %v794, %v794
        %v811 = vsel %vm795, %v809, 0.0
        %v812 = vsel %vm795, %v810, 0.0
        %v813 = vadd.f32 %v811, %v812
        %814 = vadd.xlane.f32.xlu0 %v813
        %v815 = vpop.xlane.xlu0 %814
        %v816 = vrot.slane %v815, 4
        %v817 = vadd.f32 %v815, %v816
        %v818 = vrot.slane %v817, 2
        %v819 = vadd.f32 %v817, %v818
        %v820 = vrot.slane %v819, 1
        %v821 = vadd.f32 %v819, %v820
        %s822 = vtos %v821
        %v823 = vstv %s822
        %v824 = vrcp.pop 1024.0
        %v825 = vmul.f32 1024.0, %v824
        %v826 = vsub.f32 1.0, %v825
        %v827 = vmul.f32 %v824, %v826
        %v828 = vadd.f32 %v824, %v827
        %vm829 = vweird.f32 %v824
        %v830 = vsel %vm829, %v824, %v828
        %v831 = vmul.f32 %v808, %v830
        %v832 = vmul.f32 %v823, %v830
        %v833 = vmul.f32 %v831, %v831
        %v834 = vsub.f32 %v832, %v833
        %v835 = vsub.f32 %v793, %v831
        %v836 = vsub.f32 %v794, %v831
        %v837 = vadd.f32 %v834, 1e-05
        %v838 = vrsqrt.pop %v837
        %v839 = vmul.f32 %v838, %v837
        %v840 = vmul.f32 %v839, %v838
        %v841 = vmul.f32 0.5, %v840
        %v842 = vsub.f32 1.5, %v841
        %v843 = vmul.f32 %v838, %v842
        %vm844 = vweird.f32 %v837
        %vm845 = vweird.f32 %v838
        %vm846 = vmor %vm844, %vm845
        %v847 = vsel %vm846, %v838, %v843
        %v848 = vmul.f32 %v835, %v847
        %v849 = vmul.f32 %v836, %v847
        %850 = vst [vmem:[#allocation3 + $0x10] sm:$0xf] %v848
        %851 = vst [vmem:[#allocation3 + $0x18] sm:$0xf] %v849
        %v852 = vld [vmem:[#allocation3] sm:$0x80]
        %v853 = vld [vmem:[#allocation3 + $0x8] sm:$0x80]
        %v854 = vld [vmem:[#allocation3 + $0x10] sm:$0x7]
        %v855 = vld [vmem:[#allocation3 + $0x18] sm:$0x7]
        %v856 = vld [vmem:[#allocation3 + $0x10] sm:$0x1e]
        %v857 = vld [vmem:[#allocation3 + $0x18] sm:$0x1e]
        %v860 = vrot.slane %v848, 1
        %v861 = vrot.slane %v849, 1
        %v864 = vrot.slane %v856, 2
        %v865 = vrot.slane %v857, 2
        %v866 = vld [vmem:[#allocation10 + $0x600] sm:$0xff]
        %v867 = vld [vmem:[#allocation10 + $0x610] sm:$0xff]
        %v868 = vld [vmem:[#allocation10 + $0x620] sm:$0xff]
        %v869 = vld [vmem:[#allocation10 + $0x630] sm:$0xff]
        %v870 = vld [vmem:[#allocation10 + $0x640] sm:$0xff]
        %v871 = vld [vmem:[#allocation10 + $0x650] sm:$0xff]
        %v872 = vld [vmem:[#allocation10 + $0x660] sm:$0xff]
        %v873 = vld [vmem:[#allocation10 + $0x670] sm:$0xff]
        %v874 = vld [vmem:[#allocation10 + $0x680] sm:$0xff]
        %v875 = vld [vmem:[#allocation10 + $0x690] sm:$0xff]
        %v876 = vld [vmem:[#allocation10 + $0x6a0] sm:$0xff]
        %v877 = vld [vmem:[#allocation10 + $0x6b0] sm:$0xff]
        %v878 = vld [vmem:[#allocation10 + $0x6c0] sm:$0xff]
        %v879 = vld [vmem:[#allocation10 + $0x6d0] sm:$0xff]
        %v880 = vld [vmem:[#allocation10 + $0x6e0] sm:$0xff]
        %v881 = vld [vmem:[#allocation10 + $0x6f0] sm:$0xff]
        %v882 = vld [vmem:[#allocation10 + $0x700] sm:$0xff]
        %v883 = vld [vmem:[#allocation10 + $0x710] sm:$0xff]
        %v884 = vld [vmem:[#allocation10 + $0x720] sm:$0xff]
        %v885 = vld [vmem:[#allocation10 + $0x730] sm:$0xff]
        %v886 = vld [vmem:[#allocation10 + $0x740] sm:$0xff]
        %v887 = vld [vmem:[#allocation10 + $0x750] sm:$0xff]
        %v888 = vld [vmem:[#allocation10 + $0x760] sm:$0xff]
        %v889 = vld [vmem:[#allocation10 + $0x770] sm:$0xff]
        %v890 = vld [vmem:[#allocation10 + $0x780] sm:$0xff]
        %v891 = vld [vmem:[#allocation10 + $0x790] sm:$0xff]
        %v892 = vld [vmem:[#allocation10 + $0x7a0] sm:$0xff]
        %v893 = vld [vmem:[#allocation10 + $0x7b0] sm:$0xff]
        %v894 = vld [vmem:[#allocation10 + $0x7c0] sm:$0xff]
        %v895 = vld [vmem:[#allocation10 + $0x7d0] sm:$0xff]
        %v896 = vld [vmem:[#allocation10 + $0x7e0] sm:$0xff]
        %v897 = vld [vmem:[#allocation10 + $0x7f0] sm:$0xff]
        %v898 = vld [vmem:[#allocation10 + $0x800] sm:$0xff]
        %v899 = vld [vmem:[#allocation10 + $0x810] sm:$0xff]
        %v900 = vld [vmem:[#allocation10 + $0x820] sm:$0xff]
        %v901 = vld [vmem:[#allocation10 + $0x830] sm:$0xff]
        %v902 = vld [vmem:[#allocation10 + $0x840] sm:$0xff]
        %v903 = vld [vmem:[#allocation10 + $0x850] sm:$0xff]
        %v904 = vld [vmem:[#allocation10 + $0x860] sm:$0xff]
        %v905 = vld [vmem:[#allocation10 + $0x870] sm:$0xff]
        %v906 = vld [vmem:[#allocation10 + $0x880] sm:$0xff]
        %v907 = vld [vmem:[#allocation10 + $0x890] sm:$0xff]
        %v908 = vld [vmem:[#allocation10 + $0x8a0] sm:$0xff]
        %v909 = vld [vmem:[#allocation10 + $0x8b0] sm:$0xff]
        %v910 = vld [vmem:[#allocation10 + $0x8c0] sm:$0xff]
        %v911 = vld [vmem:[#allocation10 + $0x8d0] sm:$0xff]
        %v912 = vld [vmem:[#allocation10 + $0x8e0] sm:$0xff]
        %v913 = vld [vmem:[#allocation10 + $0x8f0] sm:$0xff]
        %v914 = vld [vmem:[#allocation10 + $0x900] sm:$0xff]
        %v915 = vld [vmem:[#allocation10 + $0x910] sm:$0xff]
        %v916 = vld [vmem:[#allocation10 + $0x920] sm:$0xff]
        %v917 = vld [vmem:[#allocation10 + $0x930] sm:$0xff]
        %v918 = vld [vmem:[#allocation10 + $0x940] sm:$0xff]
        %v919 = vld [vmem:[#allocation10 + $0x950] sm:$0xff]
        %v920 = vld [vmem:[#allocation10 + $0x960] sm:$0xff]
        %v921 = vld [vmem:[#allocation10 + $0x970] sm:$0xff]
        %v922 = vld [vmem:[#allocation10 + $0x980] sm:$0xff]
        %v923 = vld [vmem:[#allocation10 + $0x990] sm:$0xff]
        %v924 = vld [vmem:[#allocation10 + $0x9a0] sm:$0xff]
        %v925 = vld [vmem:[#allocation10 + $0x9b0] sm:$0xff]
        %v926 = vld [vmem:[#allocation10 + $0x9c0] sm:$0xff]
        %v927 = vld [vmem:[#allocation10 + $0x9d0] sm:$0xff]
        %v928 = vld [vmem:[#allocation10 + $0x9e0] sm:$0xff]
        %v929 = vld [vmem:[#allocation10 + $0x9f0] sm:$0xff]
        %v930 = vld [vmem:[#allocation10 + $0xa00] sm:$0xff]
        %v931 = vld [vmem:[#allocation10 + $0xa10] sm:$0xff]
        %v932 = vld [vmem:[#allocation10 + $0xa20] sm:$0xff]
        %v933 = vld [vmem:[#allocation10 + $0xa30] sm:$0xff]
        %v934 = vld [vmem:[#allocation10 + $0xa40] sm:$0xff]
        %v935 = vld [vmem:[#allocation10 + $0xa50] sm:$0xff]
        %v936 = vld [vmem:[#allocation10 + $0xa60] sm:$0xff]
        %v937 = vld [vmem:[#allocation10 + $0xa70] sm:$0xff]
        %v938 = vld [vmem:[#allocation10 + $0xa80] sm:$0xff]
        %v939 = vld [vmem:[#allocation10 + $0xa90] sm:$0xff]
        %v940 = vld [vmem:[#allocation10 + $0xaa0] sm:$0xff]
        %v941 = vld [vmem:[#allocation10 + $0xab0] sm:$0xff]
        %v942 = vld [vmem:[#allocation10 + $0xac0] sm:$0xff]
        %v943 = vld [vmem:[#allocation10 + $0xad0] sm:$0xff]
        %v944 = vld [vmem:[#allocation10 + $0xae0] sm:$0xff]
        %v945 = vld [vmem:[#allocation10 + $0xaf0] sm:$0xff]
        %v946 = vld [vmem:[#allocation10 + $0xb00] sm:$0xff]
        %v947 = vld [vmem:[#allocation10 + $0xb10] sm:$0xff]
        %v948 = vld [vmem:[#allocation10 + $0xb20] sm:$0xff]
        %v949 = vld [vmem:[#allocation10 + $0xb30] sm:$0xff]
        %v950 = vld [vmem:[#allocation10 + $0xb40] sm:$0xff]
        %v951 = vld [vmem:[#allocation10 + $0xb50] sm:$0xff]
        %v952 = vld [vmem:[#allocation10 + $0xb60] sm:$0xff]
        %v953 = vld [vmem:[#allocation10 + $0xb70] sm:$0xff]
        %v954 = vld [vmem:[#allocation10 + $0xb80] sm:$0xff]
        %v955 = vld [vmem:[#allocation10 + $0xb90] sm:$0xff]
        %v956 = vld [vmem:[#allocation10 + $0xba0] sm:$0xff]
        %v957 = vld [vmem:[#allocation10 + $0xbb0] sm:$0xff]
        %v958 = vld [vmem:[#allocation10 + $0xbc0] sm:$0xff]
        %v959 = vld [vmem:[#allocation10 + $0xbd0] sm:$0xff]
        %v960 = vld [vmem:[#allocation10 + $0xbe0] sm:$0xff]
        %v961 = vld [vmem:[#allocation10 + $0xbf0] sm:$0xff]
        %v962 = vld [vmem:[#allocation10 + $0xc90] ss:$0 sm:$0xff]
        %v967 = vrot.slane %v852, 7
        %v968 = vrot.slane %v854, 7
        %v969 = vsel %vm344, %v967, %v968
        %v970 = vrot.slane %v853, 7
        %v971 = vrot.slane %v855, 7
        %v972 = vsel %vm344, %v970, %v971
        %v973 = vrot.slane %v860, 7
        %v974 = vsel %vm344, %v973, %v973
        %v975 = vrot.slane %v861, 7
        %v976 = vsel %vm344, %v975, %v975
        %v977 = vrot.slane %v864, 7
        %v978 = vsel %vm344, %v977, %v977
        %v979 = vrot.slane %v865, 7
        %v980 = vsel %vm344, %v979, %v979
        %987 = vmatpush.msra.mxu0 %v881
        %988 = vmatpush.msra.mxu0 %v880
        %989 = vmatpush.msra.mxu0 %v879
        %990 = vmatpush.msra.mxu0 %v878
        %991 = vmatpush.msra.mxu0 %v877
        %992 = vmatpush.msra.mxu0 %v876
        %993 = vmatpush.msra.mxu0 %v875
        %994 = vmatpush.msra.mxu0 %v874
        %995 = vmatpush.msra.mxu0 %v873
        %996 = vmatpush.msra.mxu0 %v872
        %997 = vmatpush.msra.mxu0 %v871
        %998 = vmatpush.msra.mxu0 %v870
        %999 = vmatpush.msra.mxu0 %v869
        %1000 = vmatpush.msra.mxu0 %v868
        %1001 = vmatpush.msra.mxu0 %v867
        %1002 = vmatpush.msra.mxu0 %v866
        %1003 = vmatmul.f32.gmra.mxu0 %v969
        %v1004 = vpop.f32.mrf.mxu0
        %v1005 = vadd.f32 %v962, %v1004
        %1006 = vdwg.mxu0
        %1007 = vmatpush.msra.mxu0 %v897
        %1008 = vmatpush.msra.mxu0 %v896
        %1009 = vmatpush.msra.mxu0 %v895
        %1010 = vmatpush.msra.mxu0 %v894
        %1011 = vmatpush.msra.mxu0 %v893
        %1012 = vmatpush.msra.mxu0 %v892
        %1013 = vmatpush.msra.mxu0 %v891
        %1014 = vmatpush.msra.mxu0 %v890
        %1015 = vmatpush.msra.mxu0 %v889
        %1016 = vmatpush.msra.mxu0 %v888
        %1017 = vmatpush.msra.mxu0 %v887
        %1018 = vmatpush.msra.mxu0 %v886
        %1019 = vmatpush.msra.mxu0 %v885
        %1020 = vmatpush.msra.mxu0 %v884
        %1021 = vmatpush.msra.mxu0 %v883
        %1022 = vmatpush.msra.mxu0 %v882
        %1023 = vmatmul.f32.gmra.mxu0 %v972
        %v1024 = vpop.f32.mrf.mxu0
        %v1025 = vadd.f32 %v1005, %v1024
        %1026 = vdwg.mxu0
        %1027 = vmatpush.msra.mxu0 %v913
        %1028 = vmatpush.msra.mxu0 %v912
        %1029 = vmatpush.msra.mxu0 %v911
        %1030 = vmatpush.msra.mxu0 %v910
        %1031 = vmatpush.msra.mxu0 %v909
        %1032 = vmatpush.msra.mxu0 %v908
        %1033 = vmatpush.msra.mxu0 %v907
        %1034 = vmatpush.msra.mxu0 %v906
        %1035 = vmatpush.msra.mxu0 %v905
        %1036 = vmatpush.msra.mxu0 %v904
        %1037 = vmatpush.msra.mxu0 %v903
        %1038 = vmatpush.msra.mxu0 %v902
        %1039 = vmatpush.msra.mxu0 %v901
        %1040 = vmatpush.msra.mxu0 %v900
        %1041 = vmatpush.msra.mxu0 %v899
        %1042 = vmatpush.msra.mxu0 %v898
        %1043 = vmatmul.f32.gmra.mxu0 %v974
        %v1044 = vpop.f32.mrf.mxu0
        %v1045 = vadd.f32 %v1025, %v1044
        %1046 = vdwg.mxu0
        %1047 = vmatpush.msra.mxu0 %v929
        %1048 = vmatpush.msra.mxu0 %v928
        %1049 = vmatpush.msra.mxu0 %v927
        %1050 = vmatpush.msra.mxu0 %v926
        %1051 = vmatpush.msra.mxu0 %v925
        %1052 = vmatpush.msra.mxu0 %v924
        %1053 = vmatpush.msra.mxu0 %v923
        %1054 = vmatpush.msra.mxu0 %v922
        %1055 = vmatpush.msra.mxu0 %v921
        %1056 = vmatpush.msra.mxu0 %v920
        %1057 = vmatpush.msra.mxu0 %v919
        %1058 = vmatpush.msra.mxu0 %v918
        %1059 = vmatpush.msra.mxu0 %v917
        %1060 = vmatpush.msra.mxu0 %v916
        %1061 = vmatpush.msra.mxu0 %v915
        %1062 = vmatpush.msra.mxu0 %v914
        %1063 = vmatmul.f32.gmra.mxu0 %v976
        %v1064 = vpop.f32.mrf.mxu0
        %v1065 = vadd.f32 %v1045, %v1064
        %1066 = vdwg.mxu0
        %1067 = vmatpush.msra.mxu0 %v945
        %1068 = vmatpush.msra.mxu0 %v944
        %1069 = vmatpush.msra.mxu0 %v943
        %1070 = vmatpush.msra.mxu0 %v942
        %1071 = vmatpush.msra.mxu0 %v941
        %1072 = vmatpush.msra.mxu0 %v940
        %1073 = vmatpush.msra.mxu0 %v939
        %1074 = vmatpush.msra.mxu0 %v938
        %1075 = vmatpush.msra.mxu0 %v937
        %1076 = vmatpush.msra.mxu0 %v936
        %1077 = vmatpush.msra.mxu0 %v935
        %1078 = vmatpush.msra.mxu0 %v934
        %1079 = vmatpush.msra.mxu0 %v933
        %1080 = vmatpush.msra.mxu0 %v932
        %1081 = vmatpush.msra.mxu0 %v931
        %1082 = vmatpush.msra.mxu0 %v930
        %1083 = vmatmul.f32.gmra.mxu0 %v978
        %v1084 = vpop.f32.mrf.mxu0
        %v1085 = vadd.f32 %v1065, %v1084
        %1086 = vdwg.mxu0
        %1087 = vmatpush.msra.mxu0 %v961
        %1088 = vmatpush.msra.mxu0 %v960
        %1089 = vmatpush.msra.mxu0 %v959
        %1090 = vmatpush.msra.mxu0 %v958
        %1091 = vmatpush.msra.mxu0 %v957
        %1092 = vmatpush.msra.mxu0 %v956
        %1093 = vmatpush.msra.mxu0 %v955
        %1094 = vmatpush.msra.mxu0 %v954
        %1095 = vmatpush.msra.mxu0 %v953
        %1096 = vmatpush.msra.mxu0 %v952
        %1097 = vmatpush.msra.mxu0 %v951
        %1098 = vmatpush.msra.mxu0 %v950
        %1099 = vmatpush.msra.mxu0 %v949
        %1100 = vmatpush.msra.mxu0 %v948
        %1101 = vmatpush.msra.mxu0 %v947
        %1102 = vmatpush.msra.mxu0 %v946
        %1103 = vmatmul.f32.gmra.mxu0 %v980
        %v1104 = vpop.f32.mrf.mxu0
        %v1105 = vadd.f32 %v1085, %v1104
        %1106 = vdwg.mxu0
        %1107 = vst [vmem:[%s302] sm:$0xf] %v1105
        %s1108 = sand.u32 %s132, 1
        %s1109 = scalar_lea.sflag [#allocation6], %s1108
        %s1110 = sand.u32 %s132, 1
        %s1111 = smul.addr %s1110, 4
        %s1112 = scalar_lea.vmem [#allocation12], %s1111
        // Predicated region
        $region53: #{tpu_custom_call.1} parent=35 // pred_check
          %p1113 = pneg %p142
        $region54: #{tpu_custom_call.1} parent=35 // pred_check_branch
          %1115 = sbr.rel (%p1113) target = $region56
        $region55: #{tpu_custom_call.1} parent=35 // pred_region
          %1117 = vsyncadd %s1109, 0
          %s1118 = smul.addr %s25, 4
          %s1119 = scalar_lea.hbm %s4, %s1118
          %s1121 = sshll.u32 %s1112, 4
          %s1122 = int_to_ptr.vmem [resolvable:$true] %s1121
          %s1123 = sshll.u32 %s1119, 4
          %s1124 = int_to_ptr.hbm [resolvable:$true] %s1123
          %1126 = dma.vmem_to_hbm [thread:$0]  %s1122, 64, %s1124, %s1109
        $region56: #{tpu_custom_call.1} parent=35 // pred_fallthru
          _
      $region36: #{tpu_custom_call.1} parent=5 // pred_fallthru
        _
      %p1127 = scmp.le.s32.totalorder 2, %s20
      // Predicated region
      $region57: #{tpu_custom_call.1} parent=5 // pred_check
        %p1128 = pneg %p1127
      $region58: #{tpu_custom_call.1} parent=5 // pred_check_branch
        %1130 = sbr.rel (%p1128) target = $region60
      $region59: #{tpu_custom_call.1} parent=5 // pred_region
        %s1131 = ssub.s32 %s20, 2
        // Predicated region
        $region61: #{tpu_custom_call.1} parent=59 // pred_check
          %p1132 = pneg %p148
        $region62: #{tpu_custom_call.1} parent=59 // pred_check_branch
          %1134 = sbr.rel (%p1132) target = $region64
        $region63: #{tpu_custom_call.1} parent=59 // pred_region
          %s1135 = sand.u32 %s133, 1
          %s1136 = scalar_lea.sflag [#allocation6], %s1135
          %s1137 = sand.u32 %s133, 1
          %s1138 = smul.addr %s1137, 4
          %s1139 = scalar_lea.vmem [#allocation12], %s1138
          %1141 = dma.done %s1136, 64
        $region64: #{tpu_custom_call.1} parent=59 // pred_fallthru
          _
      $region60: #{tpu_custom_call.1} parent=5 // pred_fallthru
        _
    $region6: #{tpu_custom_call.1} parent=1 // loop_footer
      %s24 = sadd.s32 1, %s20
    $region7: #{tpu_custom_call.1} parent=1 // loop_footer_branch
      %19 = sbr.rel target = $region3
    $region8: #{tpu_custom_call.1} parent=1 // loop_exit
      _
    %1142 = vsyncpa [#allocation5], 1
    %s1143 = scalar_lea.sflag [#allocation5], 1
    %1144 = vsyncpa %s1143, 1
    %1145 = vsyncpa [#allocation8], 1
    %s1146 = scalar_lea.sflag [#allocation8], 1
    %1147 = vsyncpa %s1146, 1
    %1148 = vsyncpa [#allocation11], 1
    %1149 = vsyncpa [#allocation6], 1
    %s1150 = scalar_lea.sflag [#allocation6], 1
    %1151 = vsyncpa %s1150, 1

</llo_original>
